<compile_context>
chip_gen: v6e
topology: v6e:2x2x1
jax: 0.10.0
libtpu: 0.0.40
codegen_flags: <defaults>
</compile_context>

<pallas_src>
import jax
import jax.numpy as jnp
from jax.experimental import pallas as pl
from jax.experimental.pallas import tpu as pltpu

NEW_STATE_DIM = 128   # tournament state encoding dim (synthetic, lane-aligned)
HIDDEN_DIM = 256
NUM_ACTIONS = 6
Q_PAD = 128           # lane-dense padded output width
LN_EPS = 1e-5

# Packed-slab layout (built in pack_kernel_params):
#   weight slab (bf16, 256 rows, width 8*256 + 128 = 2176):
#     [w2 | r1aw | r1bw | r2aw | r2bw | r3aw | r3bw | h1_w | h2_w(128)]
#   param slab  (f32, 1 row, width 15*256 + 128 = 3968):
#     [b1 b2 | r1ab r1bb r1g r1e | r2ab r2bb r2g r2e | r3ab r3bb r3g r3e | h1_b | h2_b(128)]
W_SLAB_COLS = 8 * HIDDEN_DIM + Q_PAD
P_SLAB_COLS = 15 * HIDDEN_DIM + Q_PAD


# ----------------------------------------------------------------------------
# Pallas kernel: one batch tile (TM rows) per grid step; weight/param slabs are
# block-invariant and stay VMEM-resident across grid steps.
# ----------------------------------------------------------------------------
def _bestpoker_kernel(x_ref, w1_ref, wslab_ref, pslab_ref, q_ref):
    H = HIDDEN_DIM

    def w_at(idx, width=H):
        return wslab_ref[:, pl.ds(idx * H, width)]

    def p_at(idx, width=H):
        return pslab_ref[:, pl.ds(idx * H, width)]

    def linear(h, w, b):
        # bf16 MXU inputs, f32 accumulation, f32 bias add.
        return jnp.dot(h.astype(w.dtype), w, preferred_element_type=jnp.float32) + b

    def relu(h):
        return jnp.maximum(h, 0.0)

    def res_block(h, wa, ba, wb, bb, g, e):
        out = relu(linear(h, wa, ba))
        out = linear(out, wb, bb) + h
        mu = jnp.mean(out, axis=-1, keepdims=True)
        centered = out - mu                                   # reused below
        var = jnp.mean(centered * centered, axis=-1, keepdims=True)
        out = centered * jax.lax.rsqrt(var + LN_EPS) * g + e
        return relu(out)

    h = relu(linear(x_ref[...], w1_ref[...], p_at(0)))        # fc1 (noisy)
    h = relu(linear(h, w_at(0), p_at(1)))                     # fc2 (noisy)
    for blk in range(3):                                      # residual blocks
        h = res_block(
            h,
            w_at(1 + 2 * blk), p_at(2 + 4 * blk),
            w_at(2 + 2 * blk), p_at(3 + 4 * blk),
            p_at(4 + 4 * blk), p_at(5 + 4 * blk))

    # Fused dueling heads: hid = [value_hid | adv_hid]; the second matmul's weights
    # already encode q_i = value + adv_i - mean_j(adv_j) (folded at pack time), so
    # it emits Q directly.  Lanes NUM_ACTIONS..127 are exactly zero; wrapper slices.
    hid = relu(linear(h, w_at(7), p_at(14)))                  # (TM, 256)
    q_ref[...] = linear(hid, w_at(8, Q_PAD), p_at(15, Q_PAD))  # (TM, 128)


def _round_up(n, m):
    return (n + m - 1) // m * m


def _pick_tm(batch):
    """Batch tile <= 128, multiple of 16 (bf16-friendly); prefer grid >= 2
    (v7x dual-TC), then minimal padding, then the largest tile."""
    upper = min(128, _round_up(max(batch, 16), 16))
    candidates = range(16, upper + 1, 16)

    def key(tm):
        bp = _round_up(batch, tm)
        return (0 if bp // tm >= 2 else 1, bp - batch, -tm)

    return min(candidates, key=key)


def bestpoker_forward(x, kernel_params, *, tm=None):
    """x: (B, NEW_STATE_DIM) f32; kernel_params: [w1_bf16, weight_slab, param_slab]."""
    batch, in_dim = x.shape
    assert in_dim == NEW_STATE_DIM
    w1, wslab, pslab = kernel_params
    assert wslab.shape == (HIDDEN_DIM, W_SLAB_COLS)
    assert pslab.shape == (1, P_SLAB_COLS)

    if tm is None:
        tm = _pick_tm(batch)
    batch_p = _round_up(batch, tm)

    x = x.astype(jnp.bfloat16)
    if batch_p != batch:
        x = jnp.pad(x, ((0, batch_p - batch), (0, 0)))

    q_pad = pl.pallas_call(
        _bestpoker_kernel,
        out_shape=jax.ShapeDtypeStruct((batch_p, Q_PAD), jnp.float32),
        grid=(batch_p // tm,),
        in_specs=[
            pl.BlockSpec((tm, NEW_STATE_DIM), lambda i: (i, 0)),
            # Block-invariant full-array specs: weights/params stay VMEM-resident.
            pl.BlockSpec(w1.shape, lambda i: (0, 0)),
            pl.BlockSpec(wslab.shape, lambda i: (0, 0)),
            pl.BlockSpec(pslab.shape, lambda i: (0, 0)),
        ],
        out_specs=pl.BlockSpec((tm, Q_PAD), lambda i: (i, 0)),
        compiler_params=pltpu.CompilerParams(dimension_semantics=("parallel",)),
    )(x, w1, wslab, pslab)
    return q_pad[:batch, :NUM_ACTIONS]


# ----------------------------------------------------------------------------
# Deterministic parameter construction (mirrors the PyTorch __init__ shapes).
# ----------------------------------------------------------------------------
def _noisy_linear_params(key, in_f, out_f, sigma_init=0.017, training=True):
    k1, k2, k3, k4 = jax.random.split(key, 4)
    mu_range = 1.0 / in_f ** 0.5
    w_mu = jax.random.uniform(k1, (out_f, in_f), jnp.float32, -mu_range, mu_range)
    w_sigma = jnp.full((out_f, in_f), sigma_init / in_f ** 0.5, jnp.float32)
    b_mu = jax.random.uniform(k2, (out_f,), jnp.float32, -mu_range, mu_range)
    b_sigma = jnp.full((out_f,), sigma_init / out_f ** 0.5, jnp.float32)
    eps_in = jax.random.normal(k3, (in_f,), jnp.float32)
    eps_out = jax.random.normal(k4, (out_f,), jnp.float32)
    f = lambda e: jnp.sign(e) * jnp.sqrt(jnp.abs(e))
    eps_in, eps_out = f(eps_in), f(eps_out)
    w_eps = jnp.outer(eps_out, eps_in)
    b_eps = eps_out
    if training:
        w = w_mu + w_sigma * w_eps
        b = b_mu + b_sigma * b_eps
    else:
        w, b = w_mu, b_mu
    return w.T, b.reshape(1, -1)           # (in, out), (1, out)


def _linear_params(key, in_f, out_f):
    k1, k2 = jax.random.split(key)
    bound = 1.0 / in_f ** 0.5
    w = jax.random.uniform(k1, (out_f, in_f), jnp.float32, -bound, bound)
    b = jax.random.uniform(k2, (out_f,), jnp.float32, -bound, bound)
    return w.T, b.reshape(1, -1)


def make_params(key, training=True):
    """Raw per-layer params (f32, original layer layout)."""
    keys = jax.random.split(key, 16)
    params = []
    # fc1, fc2 (NoisyLinear)
    params += _noisy_linear_params(keys[0], NEW_STATE_DIM, HIDDEN_DIM, training=training)
    params += _noisy_linear_params(keys[1], HIDDEN_DIM, HIDDEN_DIM, training=training)
    # 3 residual blocks
    for i in range(3):
        params += _linear_params(keys[2 + 2 * i], HIDDEN_DIM, HIDDEN_DIM)
        params += _linear_params(keys[3 + 2 * i], HIDDEN_DIM, HIDDEN_DIM)
        params += [jnp.ones((1, HIDDEN_DIM), jnp.float32),   # layernorm gamma
                   jnp.zeros((1, HIDDEN_DIM), jnp.float32)]  # layernorm beta
    # value stream
    params += _noisy_linear_params(keys[8], HIDDEN_DIM, HIDDEN_DIM // 2, training=training)
    params += _noisy_linear_params(keys[9], HIDDEN_DIM // 2, 1, training=training)
    # advantage stream
    params += _noisy_linear_params(keys[10], HIDDEN_DIM, HIDDEN_DIM // 2, training=training)
    params += _noisy_linear_params(keys[11], HIDDEN_DIM // 2, NUM_ACTIONS, training=training)
    return params


def pack_kernel_params(p):
    """Fuse the dueling heads, fold the dueling combine into head-2 weights/bias,
    cast weight matrices to bf16, and concatenate everything into three arrays."""
    (w1, b1, w2, b2,
     r1aw, r1ab, r1bw, r1bb, r1g, r1e,
     r2aw, r2ab, r2bw, r2bb, r2g, r2e,
     r3aw, r3ab, r3bw, r3bb, r3g, r3e,
     vfw, vfb, vow, vob,
     afw, afb, aow, aob) = p

    half = HIDDEN_DIM // 2
    bf = lambda w: w.astype(jnp.bfloat16)

    # Head layer 1: concat value_fc | advantage_fc -> (256, 256).
    h1_w = jnp.concatenate([vfw, afw], axis=1)               # (256, 256)
    h1_b = jnp.concatenate([vfb, afb], axis=1)               # (1, 256)

    # Head layer 2 with the dueling combine folded in (exact linear algebra):
    #   q_i = value + adv_i - mean_j(adv_j),  all linear in hid = [value_hid|adv_hid].
    adv_w_fold = aow - jnp.mean(aow, axis=1, keepdims=True)   # (128, 6)
    adv_b_fold = aob - jnp.mean(aob, axis=1, keepdims=True)   # (1, 6)
    h2_w = jnp.zeros((HIDDEN_DIM, Q_PAD), jnp.float32)
    h2_w = h2_w.at[:half, :NUM_ACTIONS].set(
        jnp.broadcast_to(vow, (half, NUM_ACTIONS)))           # value -> every Q lane
    h2_w = h2_w.at[half:, :NUM_ACTIONS].set(adv_w_fold)
    h2_b = jnp.zeros((1, Q_PAD), jnp.float32)
    h2_b = h2_b.at[0, :NUM_ACTIONS].set(adv_b_fold[0] + vob[0, 0])

    wslab = jnp.concatenate(
        [bf(w) for w in (w2, r1aw, r1bw, r2aw, r2bw, r3aw, r3bw, h1_w, h2_w)],
        axis=1)                                               # (256, 2176) bf16
    pslab = jnp.concatenate(
        [b1, b2,
         r1ab, r1bb, r1g, r1e,
         r2ab, r2bb, r2g, r2e,
         r3ab, r3bb, r3g, r3e,
         h1_b, h2_b], axis=1)                                 # (1, 3968) f32
    return [bf(w1), wslab, pslab]


# ----------------------------------------------------------------------------
# Pure-JAX reference (same math incl. bf16 matmul inputs) for correctness check.
# ----------------------------------------------------------------------------
def reference_forward(x, p):
    (w1, b1, w2, b2,
     r1aw, r1ab, r1bw, r1bb, r1g, r1e,
     r2aw, r2ab, r2bw, r2bb, r2g, r2e,
     r3aw, r3ab, r3bw, r3bb, r3g, r3e,
     vfw, vfb, vow, vob,
     afw, afb, aow, aob) = p

    bf = jnp.bfloat16
    relu = lambda h: jnp.maximum(h, 0.0)

    def lin(h, w, b):
        return jnp.dot(h.astype(bf), w.astype(bf),
                       preferred_element_type=jnp.float32) + b

    def rb(h, wa, ba, wb, bb, g, e):
        o = relu(lin(h, wa, ba))
        o = lin(o, wb, bb) + h
        mu = o.mean(-1, keepdims=True)
        var = ((o - mu) ** 2).mean(-1, keepdims=True)
        o = (o - mu) * jax.lax.rsqrt(var + LN_EPS) * g + e
        return relu(o)

    h = relu(lin(x, w1, b1))
    h = relu(lin(h, w2, b2))
    h = rb(h, r1aw, r1ab, r1bw, r1bb, r1g, r1e)
    h = rb(h, r2aw, r2ab, r2bw, r2bb, r2g, r2e)
    h = rb(h, r3aw, r3ab, r3bw, r3bb, r3g, r3e)
    v = lin(relu(lin(h, vfw, vfb)), vow, vob)
    a = lin(relu(lin(h, afw, afb)), aow, aob)
    return v + a - a.mean(-1, keepdims=True)


if __name__ == "__main__":
    key = jax.random.PRNGKey(0)
    k_x, k_p = jax.random.split(key)

    batch = 8
    x = jax.random.normal(k_x, (batch, NEW_STATE_DIM), jnp.float32)
    raw_params = make_params(k_p, training=True)
    kernel_params = pack_kernel_params(raw_params)

    q = bestpoker_forward(x, kernel_params)
    q = jax.block_until_ready(q)

    q_ref = reference_forward(x, raw_params)
    assert q.shape == (batch, NUM_ACTIONS)
    assert jnp.allclose(q, q_ref, rtol=2e-2, atol=2e-2), "mismatch vs reference"

    print("KERNEL_OK")
</pallas_src>

<mosaic_0001>
module attributes {stable_mosaic.version = 11 : i64} {
  func.func @_bestpoker_kernel(%arg0: i32, %arg1: memref<16x128xbf16, #tpu.memory_space<vmem>>, %arg2: memref<128x256xbf16, #tpu.memory_space<vmem>>, %arg3: memref<256x2176xbf16, #tpu.memory_space<vmem>>, %arg4: memref<1x3968xf32, #tpu.memory_space<vmem>>, %arg5: memref<16x128xf32, #tpu.memory_space<vmem>>) attributes {dimension_semantics = [#tpu.dimension_semantics<parallel>], iteration_bounds = array<i64: 1>, scalar_prefetch = 0 : i64, scratch_operands = 0 : i64, tpu.core_type = #tpu.core_type<tc>, window_params = [{transform_indices = @transform_0, window_bounds = array<i64: 16, 128>}, {pipeline_mode = #tpu.pipeline_mode<synchronous>, transform_indices = @transform_1, window_bounds = array<i64: 128, 256>}, {pipeline_mode = #tpu.pipeline_mode<synchronous>, transform_indices = @transform_2, window_bounds = array<i64: 256, 2176>}, {pipeline_mode = #tpu.pipeline_mode<synchronous>, transform_indices = @transform_3, window_bounds = array<i64: 1, 3968>}, {transform_indices = @transform_4, window_bounds = array<i64: 16, 128>}]} {
    %c0 = arith.constant 0 : index
    %c0_0 = arith.constant 0 : index
    %0 = vector.load %arg1[%c0, %c0_0] : memref<16x128xbf16, #tpu.memory_space<vmem>>, vector<16x128xbf16>
    %c0_1 = arith.constant 0 : index
    %c0_2 = arith.constant 0 : index
    %1 = vector.load %arg2[%c0_1, %c0_2] : memref<128x256xbf16, #tpu.memory_space<vmem>>, vector<128x256xbf16>
    %c0_3 = arith.constant 0 : index
    %c0_4 = arith.constant 0 : index
    %2 = vector.load %arg4[%c0_3, %c0_4] : memref<1x3968xf32, #tpu.memory_space<vmem>>, vector<1x256xf32>
    %cst = arith.constant dense<0.000000e+00> : vector<16x256xf32>
    %3 = tpu.matmul %0, %1, %cst {dimension_numbers = #tpu.dot_dimension_numbers<[1], [0], [0], [1], [0, 0, 1, 1], [], []>} : vector<16x128xbf16>, vector<128x256xbf16>, vector<16x256xf32> -> vector<16x256xf32>
    %4 = vector.broadcast %2 : vector<1x256xf32> to vector<16x256xf32>
    %5 = arith.addf %3, %4 : vector<16x256xf32>
    %cst_5 = arith.constant 0.000000e+00 : f32
    %6 = vector.broadcast %cst_5 : f32 to vector<16x256xf32>
    %7 = arith.maximumf %5, %6 : vector<16x256xf32>
    %c0_6 = arith.constant 0 : index
    %c0_7 = arith.constant 0 : index
    %8 = vector.load %arg3[%c0_6, %c0_7] : memref<256x2176xbf16, #tpu.memory_space<vmem>>, vector<256x256xbf16>
    %c0_8 = arith.constant 0 : index
    %c256 = arith.constant 256 : index
    %9 = vector.load %arg4[%c0_8, %c256] : memref<1x3968xf32, #tpu.memory_space<vmem>>, vector<1x256xf32>
    %10 = arith.truncf %7 : vector<16x256xf32> to vector<16x256xbf16>
    %cst_9 = arith.constant dense<0.000000e+00> : vector<16x256xf32>
    %11 = tpu.matmul %10, %8, %cst_9 {dimension_numbers = #tpu.dot_dimension_numbers<[1], [0], [0], [1], [0, 0, 1, 1], [], []>} : vector<16x256xbf16>, vector<256x256xbf16>, vector<16x256xf32> -> vector<16x256xf32>
    %12 = vector.broadcast %9 : vector<1x256xf32> to vector<16x256xf32>
    %13 = arith.addf %11, %12 : vector<16x256xf32>
    %cst_10 = arith.constant 0.000000e+00 : f32
    %14 = vector.broadcast %cst_10 : f32 to vector<16x256xf32>
    %15 = arith.maximumf %13, %14 : vector<16x256xf32>
    %c0_11 = arith.constant 0 : index
    %c256_12 = arith.constant 256 : index
    %16 = vector.load %arg3[%c0_11, %c256_12] : memref<256x2176xbf16, #tpu.memory_space<vmem>>, vector<256x256xbf16>
    %c0_13 = arith.constant 0 : index
    %c512 = arith.constant 512 : index
    %17 = vector.load %arg4[%c0_13, %c512] : memref<1x3968xf32, #tpu.memory_space<vmem>>, vector<1x256xf32>
    %c0_14 = arith.constant 0 : index
    %c512_15 = arith.constant 512 : index
    %18 = vector.load %arg3[%c0_14, %c512_15] : memref<256x2176xbf16, #tpu.memory_space<vmem>>, vector<256x256xbf16>
    %c0_16 = arith.constant 0 : index
    %c768 = arith.constant 768 : index
    %19 = vector.load %arg4[%c0_16, %c768] : memref<1x3968xf32, #tpu.memory_space<vmem>>, vector<1x256xf32>
    %c0_17 = arith.constant 0 : index
    %c1024 = arith.constant 1024 : index
    %20 = vector.load %arg4[%c0_17, %c1024] : memref<1x3968xf32, #tpu.memory_space<vmem>>, vector<1x256xf32>
    %c0_18 = arith.constant 0 : index
    %c1280 = arith.constant 1280 : index
    %21 = vector.load %arg4[%c0_18, %c1280] : memref<1x3968xf32, #tpu.memory_space<vmem>>, vector<1x256xf32>
    %22 = arith.truncf %15 : vector<16x256xf32> to vector<16x256xbf16>
    %cst_19 = arith.constant dense<0.000000e+00> : vector<16x256xf32>
    %23 = tpu.matmul %22, %16, %cst_19 {dimension_numbers = #tpu.dot_dimension_numbers<[1], [0], [0], [1], [0, 0, 1, 1], [], []>} : vector<16x256xbf16>, vector<256x256xbf16>, vector<16x256xf32> -> vector<16x256xf32>
    %24 = vector.broadcast %17 : vector<1x256xf32> to vector<16x256xf32>
    %25 = arith.addf %23, %24 : vector<16x256xf32>
    %cst_20 = arith.constant 0.000000e+00 : f32
    %26 = vector.broadcast %cst_20 : f32 to vector<16x256xf32>
    %27 = arith.maximumf %25, %26 : vector<16x256xf32>
    %28 = arith.truncf %27 : vector<16x256xf32> to vector<16x256xbf16>
    %cst_21 = arith.constant dense<0.000000e+00> : vector<16x256xf32>
    %29 = tpu.matmul %28, %18, %cst_21 {dimension_numbers = #tpu.dot_dimension_numbers<[1], [0], [0], [1], [0, 0, 1, 1], [], []>} : vector<16x256xbf16>, vector<256x256xbf16>, vector<16x256xf32> -> vector<16x256xf32>
    %30 = vector.broadcast %19 : vector<1x256xf32> to vector<16x256xf32>
    %31 = arith.addf %29, %30 : vector<16x256xf32>
    %32 = arith.addf %31, %15 : vector<16x256xf32>
    %cst_22 = arith.constant dense<0.000000e+00> : vector<16xf32>
    %33 = vector.multi_reduction <add>, %32, %cst_22 [1] : vector<16x256xf32> to vector<16xf32>
    %34 = vector.shape_cast %33 : vector<16xf32> to vector<16x1xf32>
    %cst_23 = arith.constant 2.560000e+02 : f32
    %35 = vector.broadcast %cst_23 : f32 to vector<16x1xf32>
    %36 = arith.divf %34, %35 : vector<16x1xf32>
    %37 = vector.broadcast %36 : vector<16x1xf32> to vector<16x256xf32>
    %38 = arith.subf %32, %37 : vector<16x256xf32>
    %39 = arith.mulf %38, %38 : vector<16x256xf32>
    %cst_24 = arith.constant dense<0.000000e+00> : vector<16xf32>
    %40 = vector.multi_reduction <add>, %39, %cst_24 [1] : vector<16x256xf32> to vector<16xf32>
    %41 = vector.shape_cast %40 : vector<16xf32> to vector<16x1xf32>
    %cst_25 = arith.constant 2.560000e+02 : f32
    %42 = vector.broadcast %cst_25 : f32 to vector<16x1xf32>
    %43 = arith.divf %41, %42 : vector<16x1xf32>
    %cst_26 = arith.constant 9.99999974E-6 : f32
    %44 = vector.broadcast %cst_26 : f32 to vector<16x1xf32>
    %45 = arith.addf %43, %44 : vector<16x1xf32>
    %46 = math.rsqrt %45 : vector<16x1xf32>
    %47 = vector.broadcast %46 : vector<16x1xf32> to vector<16x256xf32>
    %48 = arith.mulf %38, %47 : vector<16x256xf32>
    %49 = vector.broadcast %20 : vector<1x256xf32> to vector<16x256xf32>
    %50 = arith.mulf %48, %49 : vector<16x256xf32>
    %51 = vector.broadcast %21 : vector<1x256xf32> to vector<16x256xf32>
    %52 = arith.addf %50, %51 : vector<16x256xf32>
    %cst_27 = arith.constant 0.000000e+00 : f32
    %53 = vector.broadcast %cst_27 : f32 to vector<16x256xf32>
    %54 = arith.maximumf %52, %53 : vector<16x256xf32>
    %c0_28 = arith.constant 0 : index
    %c768_29 = arith.constant 768 : index
    %55 = vector.load %arg3[%c0_28, %c768_29] : memref<256x2176xbf16, #tpu.memory_space<vmem>>, vector<256x256xbf16>
    %c0_30 = arith.constant 0 : index
    %c1536 = arith.constant 1536 : index
    %56 = vector.load %arg4[%c0_30, %c1536] : memref<1x3968xf32, #tpu.memory_space<vmem>>, vector<1x256xf32>
    %c0_31 = arith.constant 0 : index
    %c1024_32 = arith.constant 1024 : index
    %57 = vector.load %arg3[%c0_31, %c1024_32] : memref<256x2176xbf16, #tpu.memory_space<vmem>>, vector<256x256xbf16>
    %c0_33 = arith.constant 0 : index
    %c1792 = arith.constant 1792 : index
    %58 = vector.load %arg4[%c0_33, %c1792] : memref<1x3968xf32, #tpu.memory_space<vmem>>, vector<1x256xf32>
    %c0_34 = arith.constant 0 : index
    %c2048 = arith.constant 2048 : index
    %59 = vector.load %arg4[%c0_34, %c2048] : memref<1x3968xf32, #tpu.memory_space<vmem>>, vector<1x256xf32>
    %c0_35 = arith.constant 0 : index
    %c2304 = arith.constant 2304 : index
    %60 = vector.load %arg4[%c0_35, %c2304] : memref<1x3968xf32, #tpu.memory_space<vmem>>, vector<1x256xf32>
    %61 = arith.truncf %54 : vector<16x256xf32> to vector<16x256xbf16>
    %cst_36 = arith.constant dense<0.000000e+00> : vector<16x256xf32>
    %62 = tpu.matmul %61, %55, %cst_36 {dimension_numbers = #tpu.dot_dimension_numbers<[1], [0], [0], [1], [0, 0, 1, 1], [], []>} : vector<16x256xbf16>, vector<256x256xbf16>, vector<16x256xf32> -> vector<16x256xf32>
    %63 = vector.broadcast %56 : vector<1x256xf32> to vector<16x256xf32>
    %64 = arith.addf %62, %63 : vector<16x256xf32>
    %cst_37 = arith.constant 0.000000e+00 : f32
    %65 = vector.broadcast %cst_37 : f32 to vector<16x256xf32>
    %66 = arith.maximumf %64, %65 : vector<16x256xf32>
    %67 = arith.truncf %66 : vector<16x256xf32> to vector<16x256xbf16>
    %cst_38 = arith.constant dense<0.000000e+00> : vector<16x256xf32>
    %68 = tpu.matmul %67, %57, %cst_38 {dimension_numbers = #tpu.dot_dimension_numbers<[1], [0], [0], [1], [0, 0, 1, 1], [], []>} : vector<16x256xbf16>, vector<256x256xbf16>, vector<16x256xf32> -> vector<16x256xf32>
    %69 = vector.broadcast %58 : vector<1x256xf32> to vector<16x256xf32>
    %70 = arith.addf %68, %69 : vector<16x256xf32>
    %71 = arith.addf %70, %54 : vector<16x256xf32>
    %cst_39 = arith.constant dense<0.000000e+00> : vector<16xf32>
    %72 = vector.multi_reduction <add>, %71, %cst_39 [1] : vector<16x256xf32> to vector<16xf32>
    %73 = vector.shape_cast %72 : vector<16xf32> to vector<16x1xf32>
    %cst_40 = arith.constant 2.560000e+02 : f32
    %74 = vector.broadcast %cst_40 : f32 to vector<16x1xf32>
    %75 = arith.divf %73, %74 : vector<16x1xf32>
    %76 = vector.broadcast %75 : vector<16x1xf32> to vector<16x256xf32>
    %77 = arith.subf %71, %76 : vector<16x256xf32>
    %78 = arith.mulf %77, %77 : vector<16x256xf32>
    %cst_41 = arith.constant dense<0.000000e+00> : vector<16xf32>
    %79 = vector.multi_reduction <add>, %78, %cst_41 [1] : vector<16x256xf32> to vector<16xf32>
    %80 = vector.shape_cast %79 : vector<16xf32> to vector<16x1xf32>
    %cst_42 = arith.constant 2.560000e+02 : f32
    %81 = vector.broadcast %cst_42 : f32 to vector<16x1xf32>
    %82 = arith.divf %80, %81 : vector<16x1xf32>
    %cst_43 = arith.constant 9.99999974E-6 : f32
    %83 = vector.broadcast %cst_43 : f32 to vector<16x1xf32>
    %84 = arith.addf %82, %83 : vector<16x1xf32>
    %85 = math.rsqrt %84 : vector<16x1xf32>
    %86 = vector.broadcast %85 : vector<16x1xf32> to vector<16x256xf32>
    %87 = arith.mulf %77, %86 : vector<16x256xf32>
    %88 = vector.broadcast %59 : vector<1x256xf32> to vector<16x256xf32>
    %89 = arith.mulf %87, %88 : vector<16x256xf32>
    %90 = vector.broadcast %60 : vector<1x256xf32> to vector<16x256xf32>
    %91 = arith.addf %89, %90 : vector<16x256xf32>
    %cst_44 = arith.constant 0.000000e+00 : f32
    %92 = vector.broadcast %cst_44 : f32 to vector<16x256xf32>
    %93 = arith.maximumf %91, %92 : vector<16x256xf32>
    %c0_45 = arith.constant 0 : index
    %c1280_46 = arith.constant 1280 : index
    %94 = vector.load %arg3[%c0_45, %c1280_46] : memref<256x2176xbf16, #tpu.memory_space<vmem>>, vector<256x256xbf16>
    %c0_47 = arith.constant 0 : index
    %c2560 = arith.constant 2560 : index
    %95 = vector.load %arg4[%c0_47, %c2560] : memref<1x3968xf32, #tpu.memory_space<vmem>>, vector<1x256xf32>
    %c0_48 = arith.constant 0 : index
    %c1536_49 = arith.constant 1536 : index
    %96 = vector.load %arg3[%c0_48, %c1536_49] : memref<256x2176xbf16, #tpu.memory_space<vmem>>, vector<256x256xbf16>
    %c0_50 = arith.constant 0 : index
    %c2816 = arith.constant 2816 : index
    %97 = vector.load %arg4[%c0_50, %c2816] : memref<1x3968xf32, #tpu.memory_space<vmem>>, vector<1x256xf32>
    %c0_51 = arith.constant 0 : index
    %c3072 = arith.constant 3072 : index
    %98 = vector.load %arg4[%c0_51, %c3072] : memref<1x3968xf32, #tpu.memory_space<vmem>>, vector<1x256xf32>
    %c0_52 = arith.constant 0 : index
    %c3328 = arith.constant 3328 : index
    %99 = vector.load %arg4[%c0_52, %c3328] : memref<1x3968xf32, #tpu.memory_space<vmem>>, vector<1x256xf32>
    %100 = arith.truncf %93 : vector<16x256xf32> to vector<16x256xbf16>
    %cst_53 = arith.constant dense<0.000000e+00> : vector<16x256xf32>
    %101 = tpu.matmul %100, %94, %cst_53 {dimension_numbers = #tpu.dot_dimension_numbers<[1], [0], [0], [1], [0, 0, 1, 1], [], []>} : vector<16x256xbf16>, vector<256x256xbf16>, vector<16x256xf32> -> vector<16x256xf32>
    %102 = vector.broadcast %95 : vector<1x256xf32> to vector<16x256xf32>
    %103 = arith.addf %101, %102 : vector<16x256xf32>
    %cst_54 = arith.constant 0.000000e+00 : f32
    %104 = vector.broadcast %cst_54 : f32 to vector<16x256xf32>
    %105 = arith.maximumf %103, %104 : vector<16x256xf32>
    %106 = arith.truncf %105 : vector<16x256xf32> to vector<16x256xbf16>
    %cst_55 = arith.constant dense<0.000000e+00> : vector<16x256xf32>
    %107 = tpu.matmul %106, %96, %cst_55 {dimension_numbers = #tpu.dot_dimension_numbers<[1], [0], [0], [1], [0, 0, 1, 1], [], []>} : vector<16x256xbf16>, vector<256x256xbf16>, vector<16x256xf32> -> vector<16x256xf32>
    %108 = vector.broadcast %97 : vector<1x256xf32> to vector<16x256xf32>
    %109 = arith.addf %107, %108 : vector<16x256xf32>
    %110 = arith.addf %109, %93 : vector<16x256xf32>
    %cst_56 = arith.constant dense<0.000000e+00> : vector<16xf32>
    %111 = vector.multi_reduction <add>, %110, %cst_56 [1] : vector<16x256xf32> to vector<16xf32>
    %112 = vector.shape_cast %111 : vector<16xf32> to vector<16x1xf32>
    %cst_57 = arith.constant 2.560000e+02 : f32
    %113 = vector.broadcast %cst_57 : f32 to vector<16x1xf32>
    %114 = arith.divf %112, %113 : vector<16x1xf32>
    %115 = vector.broadcast %114 : vector<16x1xf32> to vector<16x256xf32>
    %116 = arith.subf %110, %115 : vector<16x256xf32>
    %117 = arith.mulf %116, %116 : vector<16x256xf32>
    %cst_58 = arith.constant dense<0.000000e+00> : vector<16xf32>
    %118 = vector.multi_reduction <add>, %117, %cst_58 [1] : vector<16x256xf32> to vector<16xf32>
    %119 = vector.shape_cast %118 : vector<16xf32> to vector<16x1xf32>
    %cst_59 = arith.constant 2.560000e+02 : f32
    %120 = vector.broadcast %cst_59 : f32 to vector<16x1xf32>
    %121 = arith.divf %119, %120 : vector<16x1xf32>
    %cst_60 = arith.constant 9.99999974E-6 : f32
    %122 = vector.broadcast %cst_60 : f32 to vector<16x1xf32>
    %123 = arith.addf %121, %122 : vector<16x1xf32>
    %124 = math.rsqrt %123 : vector<16x1xf32>
    %125 = vector.broadcast %124 : vector<16x1xf32> to vector<16x256xf32>
    %126 = arith.mulf %116, %125 : vector<16x256xf32>
    %127 = vector.broadcast %98 : vector<1x256xf32> to vector<16x256xf32>
    %128 = arith.mulf %126, %127 : vector<16x256xf32>
    %129 = vector.broadcast %99 : vector<1x256xf32> to vector<16x256xf32>
    %130 = arith.addf %128, %129 : vector<16x256xf32>
    %cst_61 = arith.constant 0.000000e+00 : f32
    %131 = vector.broadcast %cst_61 : f32 to vector<16x256xf32>
    %132 = arith.maximumf %130, %131 : vector<16x256xf32>
    %c0_62 = arith.constant 0 : index
    %c1792_63 = arith.constant 1792 : index
    %133 = vector.load %arg3[%c0_62, %c1792_63] : memref<256x2176xbf16, #tpu.memory_space<vmem>>, vector<256x256xbf16>
    %c0_64 = arith.constant 0 : index
    %c3584 = arith.constant 3584 : index
    %134 = vector.load %arg4[%c0_64, %c3584] : memref<1x3968xf32, #tpu.memory_space<vmem>>, vector<1x256xf32>
    %135 = arith.truncf %132 : vector<16x256xf32> to vector<16x256xbf16>
    %cst_65 = arith.constant dense<0.000000e+00> : vector<16x256xf32>
    %136 = tpu.matmul %135, %133, %cst_65 {dimension_numbers = #tpu.dot_dimension_numbers<[1], [0], [0], [1], [0, 0, 1, 1], [], []>} : vector<16x256xbf16>, vector<256x256xbf16>, vector<16x256xf32> -> vector<16x256xf32>
    %137 = vector.broadcast %134 : vector<1x256xf32> to vector<16x256xf32>
    %138 = arith.addf %136, %137 : vector<16x256xf32>
    %cst_66 = arith.constant 0.000000e+00 : f32
    %139 = vector.broadcast %cst_66 : f32 to vector<16x256xf32>
    %140 = arith.maximumf %138, %139 : vector<16x256xf32>
    %c0_67 = arith.constant 0 : index
    %c2048_68 = arith.constant 2048 : index
    %141 = vector.load %arg3[%c0_67, %c2048_68] : memref<256x2176xbf16, #tpu.memory_space<vmem>>, vector<256x128xbf16>
    %c0_69 = arith.constant 0 : index
    %c3840 = arith.constant 3840 : index
    %142 = vector.load %arg4[%c0_69, %c3840] : memref<1x3968xf32, #tpu.memory_space<vmem>>, vector<1x128xf32>
    %143 = arith.truncf %140 : vector<16x256xf32> to vector<16x256xbf16>
    %cst_70 = arith.constant dense<0.000000e+00> : vector<16x128xf32>
    %144 = tpu.matmul %143, %141, %cst_70 {dimension_numbers = #tpu.dot_dimension_numbers<[1], [0], [0], [1], [0, 0, 1, 1], [], []>} : vector<16x256xbf16>, vector<256x128xbf16>, vector<16x128xf32> -> vector<16x128xf32>
    %145 = vector.broadcast %142 : vector<1x128xf32> to vector<16x128xf32>
    %146 = arith.addf %144, %145 : vector<16x128xf32>
    %c0_71 = arith.constant 0 : index
    %c0_72 = arith.constant 0 : index
    %147 = vector.load %arg5[%c0_71, %c0_72] : memref<16x128xf32, #tpu.memory_space<vmem>>, vector<16x128xf32>
    tpu.vector_store %arg5[%c0_71, %c0_72], %146 {strides = array<i32>} : memref<16x128xf32, #tpu.memory_space<vmem>>, vector<16x128xf32>,
    return
  }
  func.func @transform_0(%arg0: i32) -> (i32, i32) {
    %c0_i32 = arith.constant 0 : i32
    %c0_i32_0 = arith.constant 0 : i32
    return %arg0, %c0_i32 : i32, i32
  }
  func.func @transform_1(%arg0: i32) -> (i32, i32) {
    %c0_i32 = arith.constant 0 : i32
    %c0_i32_0 = arith.constant 0 : i32
    %c0_i32_1 = arith.constant 0 : i32
    return %c0_i32, %c0_i32_0 : i32, i32
  }
  func.func @transform_2(%arg0: i32) -> (i32, i32) {
    %c0_i32 = arith.constant 0 : i32
    %c0_i32_0 = arith.constant 0 : i32
    %c0_i32_1 = arith.constant 0 : i32
    return %c0_i32, %c0_i32_0 : i32, i32
  }
  func.func @transform_3(%arg0: i32) -> (i32, i32) {
    %c0_i32 = arith.constant 0 : i32
    %c0_i32_0 = arith.constant 0 : i32
    %c0_i32_1 = arith.constant 0 : i32
    return %c0_i32, %c0_i32_0 : i32, i32
  }
  func.func @transform_4(%arg0: i32) -> (i32, i32) {
    %c0_i32 = arith.constant 0 : i32
    %c0_i32_0 = arith.constant 0 : i32
    return %arg0, %c0_i32 : i32, i32
  }
}

</mosaic_0001>

<llo_original>
// kernel: tpu_custom_call.1
$region0: #{tpu_custom_call.1}
  #allocation0 [shape = 'u32[]', space=smem, size = 0x4, offset = 0x4, fixed_abs, tag = 'smem constant byte address 0x4 - core index']
  #allocation1 [shape = 'u32[144,128]{1,0:T(1,128)}', space=vmem, size = 0x12000, scoped, tag = 'internal scratch']
  %s0 = inlined_call_operand.hbm [shape: bf16[16,128], index: 0, kind: input, shape index: {}]
  %s1 = inlined_call_operand.hbm [shape: bf16[128,256], index: 1, kind: input, shape index: {}]
  %s2 = inlined_call_operand.hbm [shape: bf16[256,2176], index: 2, kind: input, shape index: {}]
  %s3 = inlined_call_operand.hbm [shape: f32[1,3968], index: 3, kind: input, shape index: {}]
  %s4 = inlined_call_operand.hbm [shape: f32[16,128], index: 4, kind: output, shape index: {}]
  %s5 = sld [smem:[#allocation0]]
  $region42: #{tpu_custom_call.1} parent=0
    _
  %s7 = ssub.s32 1, %s5
  %s8 = scalar_select 0, %s7, %s5
  $region1: #{tpu_custom_call.1} parent=0
    #allocation2 [shape = 'u8[4096]{0}', space=vmem, size = 0x1000, scoped, tag = 'input window, operand 0, single buffered']
    #allocation3 [shape = 's32[1]{0}', space=sflag, size = 0x4, scoped, tag = 'scoped memory for tpu_custom_call.1']
    #allocation4 [shape = 's32[1]{0}', space=sflag, size = 0x4, scoped, tag = 'scoped memory for tpu_custom_call.1']
    #allocation5 [shape = 'u8[65536]{0}', space=vmem, size = 0x10000, scoped, tag = 'input window, operand 1, single buffered']
    #allocation6 [shape = 's32[1]{0}', space=sflag, size = 0x4, scoped, tag = 'scoped memory for tpu_custom_call.1']
    #allocation7 [shape = 'u8[1114112]{0}', space=vmem, size = 0x110000, scoped, tag = 'input window, operand 2, single buffered']
    #allocation8 [shape = 'u8[15872]{0}', space=vmem, size = 0x4000, scoped, tag = 'input window, operand 3, single buffered']
    #allocation9 [shape = 's32[1]{0}', space=sflag, size = 0x4, scoped, tag = 'scoped memory for tpu_custom_call.1']
    #allocation10 [shape = 'u8[8192]{0}', space=vmem, size = 0x2000, scoped, tag = 'output window, operand 0, single buffered']
    %9 = vsyncpa [#allocation3], 0
    %10 = vsyncpa [#allocation6], 0
    %11 = vsyncpa [#allocation9], 0
    %12 = vsyncpa [#allocation4], 0
    // Predicated region
    $region2: #{tpu_custom_call.1} parent=1 // pred_check
      _
    $region3: #{tpu_custom_call.1} parent=1 // pred_check_branch
      %14 = sbr.rel (0) target = $region5
    $region4: #{tpu_custom_call.1} parent=1 // pred_region
      %s16 = ssub.s32 128, 128
      %17 = vsyncadd [#allocation3], %s16
      %s18 = sshll.u32 [#allocation2], 4
      %s19 = int_to_ptr.vmem [resolvable:$true] %s18
      %24 = dma.hbm_to_vmem [thread:$0]  %s0, 128, %s19, [#allocation3], 64, 64, 4
    $region5: #{tpu_custom_call.1} parent=1 // pred_fallthru
      _
    // Predicated region
    $region6: #{tpu_custom_call.1} parent=1 // pred_check
      _
    $region7: #{tpu_custom_call.1} parent=1 // pred_check_branch
      %26 = sbr.rel (0) target = $region9
    $region8: #{tpu_custom_call.1} parent=1 // pred_region
      %s28 = ssub.s32 2048, 2048
      %29 = vsyncadd [#allocation6], %s28
      %s30 = sshll.u32 [#allocation5], 4
      %s31 = int_to_ptr.vmem [resolvable:$true] %s30
      %36 = dma.hbm_to_vmem [thread:$0]  %s1, 2048, %s31, [#allocation6], 128, 128, 8
    $region9: #{tpu_custom_call.1} parent=1 // pred_fallthru
      _
    // Predicated region
    $region10: #{tpu_custom_call.1} parent=1 // pred_check
      _
    $region11: #{tpu_custom_call.1} parent=1 // pred_check_branch
      %38 = sbr.rel (0) target = $region13
    $region12: #{tpu_custom_call.1} parent=1 // pred_region
      %s40 = ssub.s32 34816, 34816
      %41 = vsyncadd [#allocation6], %s40
      %s42 = sshll.u32 [#allocation7], 4
      %s43 = int_to_ptr.vmem [resolvable:$true] %s42
      %48 = dma.hbm_to_vmem [thread:$0]  %s2, 34816, %s43, [#allocation6], 1088, 1088, 68
    $region13: #{tpu_custom_call.1} parent=1 // pred_fallthru
      _
    // Predicated region
    $region14: #{tpu_custom_call.1} parent=1 // pred_check
      _
    $region15: #{tpu_custom_call.1} parent=1 // pred_check_branch
      %50 = sbr.rel (0) target = $region17
    $region16: #{tpu_custom_call.1} parent=1 // pred_region
      %s52 = ssub.s32 496, 496
      %53 = vsyncadd [#allocation9], %s52
      %s55 = sshll.u32 [#allocation8], 4
      %s56 = int_to_ptr.vmem [resolvable:$true] %s55
      %58 = dma.hbm_to_vmem [thread:$0]  %s3, 496, %s56, [#allocation9]
    $region17: #{tpu_custom_call.1} parent=1 // pred_fallthru
      _
    // Predicated region
    $region18: #{tpu_custom_call.1} parent=1 // pred_check
      _
    $region19: #{tpu_custom_call.1} parent=1 // pred_check_branch
      %60 = sbr.rel (0) target = $region21
    $region20: #{tpu_custom_call.1} parent=1 // pred_region
      %61 = dma.done [#allocation3], 128
    $region21: #{tpu_custom_call.1} parent=1 // pred_fallthru
      _
    // Predicated region
    $region22: #{tpu_custom_call.1} parent=1 // pred_check
      _
    $region23: #{tpu_custom_call.1} parent=1 // pred_check_branch
      %63 = sbr.rel (0) target = $region25
    $region24: #{tpu_custom_call.1} parent=1 // pred_region
      %64 = dma.done [#allocation6], 2048
    $region25: #{tpu_custom_call.1} parent=1 // pred_fallthru
      _
    // Predicated region
    $region26: #{tpu_custom_call.1} parent=1 // pred_check
      _
    $region27: #{tpu_custom_call.1} parent=1 // pred_check_branch
      %66 = sbr.rel (0) target = $region29
    $region28: #{tpu_custom_call.1} parent=1 // pred_region
      %67 = dma.done [#allocation6], 34816
    $region29: #{tpu_custom_call.1} parent=1 // pred_fallthru
      _
    // Predicated region
    $region30: #{tpu_custom_call.1} parent=1 // pred_check
      _
    $region31: #{tpu_custom_call.1} parent=1 // pred_check_branch
      %69 = sbr.rel (0) target = $region33
    $region32: #{tpu_custom_call.1} parent=1 // pred_region
      %70 = dma.done [#allocation9], 496
    $region33: #{tpu_custom_call.1} parent=1 // pred_fallthru
      _
    %v72 = vld [vmem:[#allocation2] sm:$0xf]
    %v73 = vld [vmem:[#allocation2 + $0x4] sm:$0xf]
    %v74 = vld [vmem:[#allocation5] sm:$0xff]
    %v75 = vld [vmem:[#allocation5 + $0x8] sm:$0xff]
    %v76 = vld [vmem:[#allocation5 + $0x10] sm:$0xff]
    %v77 = vld [vmem:[#allocation5 + $0x18] sm:$0xff]
    %v78 = vld [vmem:[#allocation5 + $0x20] sm:$0xff]
    %v79 = vld [vmem:[#allocation5 + $0x28] sm:$0xff]
    %v80 = vld [vmem:[#allocation5 + $0x30] sm:$0xff]
    %v81 = vld [vmem:[#allocation5 + $0x38] sm:$0xff]
    %v82 = vld [vmem:[#allocation5 + $0x40] sm:$0xff]
    %v83 = vld [vmem:[#allocation5 + $0x48] sm:$0xff]
    %v84 = vld [vmem:[#allocation5 + $0x50] sm:$0xff]
    %v85 = vld [vmem:[#allocation5 + $0x58] sm:$0xff]
    %v86 = vld [vmem:[#allocation5 + $0x60] sm:$0xff]
    %v87 = vld [vmem:[#allocation5 + $0x68] sm:$0xff]
    %v88 = vld [vmem:[#allocation5 + $0x70] sm:$0xff]
    %v89 = vld [vmem:[#allocation5 + $0x78] sm:$0xff]
    %v90 = vld [vmem:[#allocation8] sm:$0x3]
    %v92 = vlaneseq
    %v93 = vshrl.u32 %v92, 7
    %v94 = vsub.s32 0, %v93
    %v95 = vrot.slane %v90, %v94
    %v96 = vlaneseq
    %v97 = vshrl.u32 %v96, 7
    %v98 = vsub.s32 1, %v97
    %v99 = vrot.slane %v90, %v98
    %v104 = vunpack.c.l.b16 %v72
    %v105 = vunpack.c.l.b16 %v73
    %v106 = vpack.c.b16 %v105, %v104
    %v124 = vunpack.c.l.b16 %v74
    %v125 = vunpack.c.h.b16 %v74
    %v126 = vunpack.c.l.b16 %v75
    %v127 = vunpack.c.h.b16 %v75
    %v128 = vunpack.c.l.b16 %v76
    %v129 = vunpack.c.h.b16 %v76
    %v130 = vunpack.c.l.b16 %v77
    %v131 = vunpack.c.h.b16 %v77
    %v132 = vunpack.c.l.b16 %v78
    %v133 = vunpack.c.h.b16 %v78
    %v134 = vunpack.c.l.b16 %v79
    %v135 = vunpack.c.h.b16 %v79
    %v136 = vunpack.c.l.b16 %v80
    %v137 = vunpack.c.h.b16 %v80
    %v138 = vunpack.c.l.b16 %v81
    %v139 = vunpack.c.h.b16 %v81
    %v140 = vunpack.c.l.b16 %v82
    %v141 = vunpack.c.h.b16 %v82
    %v142 = vunpack.c.l.b16 %v83
    %v143 = vunpack.c.h.b16 %v83
    %v144 = vunpack.c.l.b16 %v84
    %v145 = vunpack.c.h.b16 %v84
    %v146 = vunpack.c.l.b16 %v85
    %v147 = vunpack.c.h.b16 %v85
    %v148 = vunpack.c.l.b16 %v86
    %v149 = vunpack.c.h.b16 %v86
    %v150 = vunpack.c.l.b16 %v87
    %v151 = vunpack.c.h.b16 %v87
    %v152 = vunpack.c.l.b16 %v88
    %v153 = vunpack.c.h.b16 %v88
    %v154 = vunpack.c.l.b16 %v89
    %v155 = vunpack.c.h.b16 %v89
    %v156 = vpack.c.b16 %v126, %v124
    %v157 = vpack.c.b16 %v127, %v125
    %v158 = vpack.c.b16 %v130, %v128
    %v159 = vpack.c.b16 %v131, %v129
    %v160 = vpack.c.b16 %v134, %v132
    %v161 = vpack.c.b16 %v135, %v133
    %v162 = vpack.c.b16 %v138, %v136
    %v163 = vpack.c.b16 %v139, %v137
    %v164 = vpack.c.b16 %v142, %v140
    %v165 = vpack.c.b16 %v143, %v141
    %v166 = vpack.c.b16 %v146, %v144
    %v167 = vpack.c.b16 %v147, %v145
    %v168 = vpack.c.b16 %v150, %v148
    %v169 = vpack.c.b16 %v151, %v149
    %v170 = vpack.c.b16 %v154, %v152
    %v171 = vpack.c.b16 %v155, %v153
    %188 = vmatprep.subr.bf16.mxu0 %v171
    %189 = vmatpush1.bf16.msra.mxu0 %v170
    %190 = vmatprep.subr.bf16.mxu0 %v169
    %191 = vmatpush1.bf16.msra.mxu0 %v168
    %192 = vmatprep.subr.bf16.mxu0 %v167
    %193 = vmatpush1.bf16.msra.mxu0 %v166
    %194 = vmatprep.subr.bf16.mxu0 %v165
    %195 = vmatpush1.bf16.msra.mxu0 %v164
    %196 = vmatprep.subr.bf16.mxu0 %v163
    %197 = vmatpush1.bf16.msra.mxu0 %v162
    %198 = vmatprep.subr.bf16.mxu0 %v161
    %199 = vmatpush1.bf16.msra.mxu0 %v160
    %200 = vmatprep.subr.bf16.mxu0 %v159
    %201 = vmatpush1.bf16.msra.mxu0 %v158
    %202 = vmatprep.subr.bf16.mxu0 %v157
    %203 = vmatpush1.bf16.msra.mxu0 %v156
    %204 = vmatprep.subr.bf16.mxu0 0
    %205 = vmatpush2.bf16.msra.mxu0 0
    %206 = vmatprep.subr.bf16.mxu0 0
    %207 = vmatpush2.bf16.msra.mxu0 0
    %208 = vmatprep.subr.bf16.mxu0 0
    %209 = vmatpush2.bf16.msra.mxu0 0
    %210 = vmatprep.subr.bf16.mxu0 0
    %211 = vmatpush2.bf16.msra.mxu0 0
    %212 = vmatprep.subr.bf16.mxu0 0
    %213 = vmatpush2.bf16.msra.mxu0 0
    %214 = vmatprep.subr.bf16.mxu0 0
    %215 = vmatpush2.bf16.msra.mxu0 0
    %216 = vmatprep.subr.bf16.mxu0 0
    %217 = vmatpush2.bf16.msra.mxu0 0
    %218 = vmatprep.subr.bf16.mxu0 0
    %219 = vmatpush2.bf16.msra.mxu0 0
    %220 = vmatprep.mubr.bf16.mxu0 0
    %221 = vmatmul.mubr.bf16.gmra.mxu0 %v106
    %v222 = vpop.f32.mrf.mxu0
    %v223 = vadd.f32 %v95, %v222
    %v224 = vpop.f32.mrf.mxu0
    %v225 = vadd.f32 %v99, %v224
    %v226 = vpop.f32.mrf.mxu0
    %v227 = vadd.f32 %v95, %v226
    %v228 = vpop.f32.mrf.mxu0
    %v229 = vadd.f32 %v99, %v228
    %230 = vdwg.mxu0
    %v231 = vmax.f32 %v223, 0.0
    %v232 = vmax.f32 %v225, 0.0
    %v233 = vmax.f32 %v227, 0.0
    %v234 = vmax.f32 %v229, 0.0
    %v235 = vld [vmem:[#allocation7] sm:$0xff]
    %v236 = vld [vmem:[#allocation7 + $0x44] sm:$0xff]
    %v237 = vld [vmem:[#allocation7 + $0x88] sm:$0xff]
    %v238 = vld [vmem:[#allocation7 + $0xcc] sm:$0xff]
    %v239 = vld [vmem:[#allocation7 + $0x110] sm:$0xff]
    %v240 = vld [vmem:[#allocation7 + $0x154] sm:$0xff]
    %v241 = vld [vmem:[#allocation7 + $0x198] sm:$0xff]
    %v242 = vld [vmem:[#allocation7 + $0x1dc] sm:$0xff]
    %v243 = vld [vmem:[#allocation7 + $0x220] sm:$0xff]
    %v244 = vld [vmem:[#allocation7 + $0x264] sm:$0xff]
    %v245 = vld [vmem:[#allocation7 + $0x2a8] sm:$0xff]
    %v246 = vld [vmem:[#allocation7 + $0x2ec] sm:$0xff]
    %v247 = vld [vmem:[#allocation7 + $0x330] sm:$0xff]
    %v248 = vld [vmem:[#allocation7 + $0x374] sm:$0xff]
    %v249 = vld [vmem:[#allocation7 + $0x3b8] sm:$0xff]
    %v250 = vld [vmem:[#allocation7 + $0x3fc] sm:$0xff]
    %v251 = vld [vmem:[#allocation7 + $0x440] sm:$0xff]
    %v252 = vld [vmem:[#allocation7 + $0x484] sm:$0xff]
    %v253 = vld [vmem:[#allocation7 + $0x4c8] sm:$0xff]
    %v254 = vld [vmem:[#allocation7 + $0x50c] sm:$0xff]
    %v255 = vld [vmem:[#allocation7 + $0x550] sm:$0xff]
    %v256 = vld [vmem:[#allocation7 + $0x594] sm:$0xff]
    %v257 = vld [vmem:[#allocation7 + $0x5d8] sm:$0xff]
    %v258 = vld [vmem:[#allocation7 + $0x61c] sm:$0xff]
    %v259 = vld [vmem:[#allocation7 + $0x660] sm:$0xff]
    %v260 = vld [vmem:[#allocation7 + $0x6a4] sm:$0xff]
    %v261 = vld [vmem:[#allocation7 + $0x6e8] sm:$0xff]
    %v262 = vld [vmem:[#allocation7 + $0x72c] sm:$0xff]
    %v263 = vld [vmem:[#allocation7 + $0x770] sm:$0xff]
    %v264 = vld [vmem:[#allocation7 + $0x7b4] sm:$0xff]
    %v265 = vld [vmem:[#allocation7 + $0x7f8] sm:$0xff]
    %v266 = vld [vmem:[#allocation7 + $0x83c] sm:$0xff]
    %v267 = vld [vmem:[#allocation8 + $0x2] sm:$0x3]
    %v268 = vpack.c.bf16 %v233, %v231
    %v269 = vpack.c.bf16 %v234, %v232
    %v271 = vlaneseq
    %v272 = vshrl.u32 %v271, 7
    %v273 = vsub.s32 0, %v272
    %v274 = vrot.slane %v267, %v273
    %v275 = vlaneseq
    %v276 = vshrl.u32 %v275, 7
    %v277 = vsub.s32 1, %v276
    %v278 = vrot.slane %v267, %v277
    %v313 = vunpack.c.l.b16 %v235
    %v314 = vunpack.c.h.b16 %v235
    %v315 = vunpack.c.l.b16 %v236
    %v316 = vunpack.c.h.b16 %v236
    %v317 = vunpack.c.l.b16 %v237
    %v318 = vunpack.c.h.b16 %v237
    %v319 = vunpack.c.l.b16 %v238
    %v320 = vunpack.c.h.b16 %v238
    %v321 = vunpack.c.l.b16 %v239
    %v322 = vunpack.c.h.b16 %v239
    %v323 = vunpack.c.l.b16 %v240
    %v324 = vunpack.c.h.b16 %v240
    %v325 = vunpack.c.l.b16 %v241
    %v326 = vunpack.c.h.b16 %v241
    %v327 = vunpack.c.l.b16 %v242
    %v328 = vunpack.c.h.b16 %v242
    %v329 = vunpack.c.l.b16 %v243
    %v330 = vunpack.c.h.b16 %v243
    %v331 = vunpack.c.l.b16 %v244
    %v332 = vunpack.c.h.b16 %v244
    %v333 = vunpack.c.l.b16 %v245
    %v334 = vunpack.c.h.b16 %v245
    %v335 = vunpack.c.l.b16 %v246
    %v336 = vunpack.c.h.b16 %v246
    %v337 = vunpack.c.l.b16 %v247
    %v338 = vunpack.c.h.b16 %v247
    %v339 = vunpack.c.l.b16 %v248
    %v340 = vunpack.c.h.b16 %v248
    %v341 = vunpack.c.l.b16 %v249
    %v342 = vunpack.c.h.b16 %v249
    %v343 = vunpack.c.l.b16 %v250
    %v344 = vunpack.c.h.b16 %v250
    %v345 = vunpack.c.l.b16 %v251
    %v346 = vunpack.c.h.b16 %v251
    %v347 = vunpack.c.l.b16 %v252
    %v348 = vunpack.c.h.b16 %v252
    %v349 = vunpack.c.l.b16 %v253
    %v350 = vunpack.c.h.b16 %v253
    %v351 = vunpack.c.l.b16 %v254
    %v352 = vunpack.c.h.b16 %v254
    %v353 = vunpack.c.l.b16 %v255
    %v354 = vunpack.c.h.b16 %v255
    %v355 = vunpack.c.l.b16 %v256
    %v356 = vunpack.c.h.b16 %v256
    %v357 = vunpack.c.l.b16 %v257
    %v358 = vunpack.c.h.b16 %v257
    %v359 = vunpack.c.l.b16 %v258
    %v360 = vunpack.c.h.b16 %v258
    %v361 = vunpack.c.l.b16 %v259
    %v362 = vunpack.c.h.b16 %v259
    %v363 = vunpack.c.l.b16 %v260
    %v364 = vunpack.c.h.b16 %v260
    %v365 = vunpack.c.l.b16 %v261
    %v366 = vunpack.c.h.b16 %v261
    %v367 = vunpack.c.l.b16 %v262
    %v368 = vunpack.c.h.b16 %v262
    %v369 = vunpack.c.l.b16 %v263
    %v370 = vunpack.c.h.b16 %v263
    %v371 = vunpack.c.l.b16 %v264
    %v372 = vunpack.c.h.b16 %v264
    %v373 = vunpack.c.l.b16 %v265
    %v374 = vunpack.c.h.b16 %v265
    %v375 = vunpack.c.l.b16 %v266
    %v376 = vunpack.c.h.b16 %v266
    %v377 = vpack.c.b16 %v315, %v313
    %v378 = vpack.c.b16 %v316, %v314
    %v379 = vpack.c.b16 %v319, %v317
    %v380 = vpack.c.b16 %v320, %v318
    %v381 = vpack.c.b16 %v323, %v321
    %v382 = vpack.c.b16 %v324, %v322
    %v383 = vpack.c.b16 %v327, %v325
    %v384 = vpack.c.b16 %v328, %v326
    %v385 = vpack.c.b16 %v331, %v329
    %v386 = vpack.c.b16 %v332, %v330
    %v387 = vpack.c.b16 %v335, %v333
    %v388 = vpack.c.b16 %v336, %v334
    %v389 = vpack.c.b16 %v339, %v337
    %v390 = vpack.c.b16 %v340, %v338
    %v391 = vpack.c.b16 %v343, %v341
    %v392 = vpack.c.b16 %v344, %v342
    %v393 = vpack.c.b16 %v347, %v345
    %v394 = vpack.c.b16 %v348, %v346
    %v395 = vpack.c.b16 %v351, %v349
    %v396 = vpack.c.b16 %v352, %v350
    %v397 = vpack.c.b16 %v355, %v353
    %v398 = vpack.c.b16 %v356, %v354
    %v399 = vpack.c.b16 %v359, %v357
    %v400 = vpack.c.b16 %v360, %v358
    %v401 = vpack.c.b16 %v363, %v361
    %v402 = vpack.c.b16 %v364, %v362
    %v403 = vpack.c.b16 %v367, %v365
    %v404 = vpack.c.b16 %v368, %v366
    %v405 = vpack.c.b16 %v371, %v369
    %v406 = vpack.c.b16 %v372, %v370
    %v407 = vpack.c.b16 %v375, %v373
    %v408 = vpack.c.b16 %v376, %v374
    %441 = vmatprep.subr.bf16.mxu0 %v392
    %442 = vmatpush1.bf16.msra.mxu0 %v391
    %443 = vmatprep.subr.bf16.mxu0 %v390
    %444 = vmatpush1.bf16.msra.mxu0 %v389
    %445 = vmatprep.subr.bf16.mxu0 %v388
    %446 = vmatpush1.bf16.msra.mxu0 %v387
    %447 = vmatprep.subr.bf16.mxu0 %v386
    %448 = vmatpush1.bf16.msra.mxu0 %v385
    %449 = vmatprep.subr.bf16.mxu0 %v384
    %450 = vmatpush1.bf16.msra.mxu0 %v383
    %451 = vmatprep.subr.bf16.mxu0 %v382
    %452 = vmatpush1.bf16.msra.mxu0 %v381
    %453 = vmatprep.subr.bf16.mxu0 %v380
    %454 = vmatpush1.bf16.msra.mxu0 %v379
    %455 = vmatprep.subr.bf16.mxu0 %v378
    %456 = vmatpush1.bf16.msra.mxu0 %v377
    %457 = vmatprep.subr.bf16.mxu0 %v408
    %458 = vmatpush2.bf16.msra.mxu0 %v407
    %459 = vmatprep.subr.bf16.mxu0 %v406
    %460 = vmatpush2.bf16.msra.mxu0 %v405
    %461 = vmatprep.subr.bf16.mxu0 %v404
    %462 = vmatpush2.bf16.msra.mxu0 %v403
    %463 = vmatprep.subr.bf16.mxu0 %v402
    %464 = vmatpush2.bf16.msra.mxu0 %v401
    %465 = vmatprep.subr.bf16.mxu0 %v400
    %466 = vmatpush2.bf16.msra.mxu0 %v399
    %467 = vmatprep.subr.bf16.mxu0 %v398
    %468 = vmatpush2.bf16.msra.mxu0 %v397
    %469 = vmatprep.subr.bf16.mxu0 %v396
    %470 = vmatpush2.bf16.msra.mxu0 %v395
    %471 = vmatprep.subr.bf16.mxu0 %v394
    %472 = vmatpush2.bf16.msra.mxu0 %v393
    %473 = vmatprep.mubr.bf16.mxu0 %v269
    %474 = vmatmul.mubr.bf16.gmra.mxu0 %v268
    %v475 = vpop.f32.mrf.mxu0
    %v476 = vadd.f32 %v274, %v475
    %v477 = vpop.f32.mrf.mxu0
    %v478 = vadd.f32 %v278, %v477
    %v479 = vpop.f32.mrf.mxu0
    %v480 = vadd.f32 %v274, %v479
    %v481 = vpop.f32.mrf.mxu0
    %v482 = vadd.f32 %v278, %v481
    %483 = vdwg.mxu0
    %v484 = vmax.f32 %v476, 0.0
    %v485 = vmax.f32 %v478, 0.0
    %v486 = vmax.f32 %v480, 0.0
    %v487 = vmax.f32 %v482, 0.0
    %v488 = vld [vmem:[#allocation7 + $0x8] sm:$0xff]
    %v489 = vld [vmem:[#allocation7 + $0x4c] sm:$0xff]
    %v490 = vld [vmem:[#allocation7 + $0x90] sm:$0xff]
    %v491 = vld [vmem:[#allocation7 + $0xd4] sm:$0xff]
    %v492 = vld [vmem:[#allocation7 + $0x118] sm:$0xff]
    %v493 = vld [vmem:[#allocation7 + $0x15c] sm:$0xff]
    %v494 = vld [vmem:[#allocation7 + $0x1a0] sm:$0xff]
    %v495 = vld [vmem:[#allocation7 + $0x1e4] sm:$0xff]
    %v496 = vld [vmem:[#allocation7 + $0x228] sm:$0xff]
    %v497 = vld [vmem:[#allocation7 + $0x26c] sm:$0xff]
    %v498 = vld [vmem:[#allocation7 + $0x2b0] sm:$0xff]
    %v499 = vld [vmem:[#allocation7 + $0x2f4] sm:$0xff]
    %v500 = vld [vmem:[#allocation7 + $0x338] sm:$0xff]
    %v501 = vld [vmem:[#allocation7 + $0x37c] sm:$0xff]
    %v502 = vld [vmem:[#allocation7 + $0x3c0] sm:$0xff]
    %v503 = vld [vmem:[#allocation7 + $0x404] sm:$0xff]
    %v504 = vld [vmem:[#allocation7 + $0x448] sm:$0xff]
    %v505 = vld [vmem:[#allocation7 + $0x48c] sm:$0xff]
    %v506 = vld [vmem:[#allocation7 + $0x4d0] sm:$0xff]
    %v507 = vld [vmem:[#allocation7 + $0x514] sm:$0xff]
    %v508 = vld [vmem:[#allocation7 + $0x558] sm:$0xff]
    %v509 = vld [vmem:[#allocation7 + $0x59c] sm:$0xff]
    %v510 = vld [vmem:[#allocation7 + $0x5e0] sm:$0xff]
    %v511 = vld [vmem:[#allocation7 + $0x624] sm:$0xff]
    %v512 = vld [vmem:[#allocation7 + $0x668] sm:$0xff]
    %v513 = vld [vmem:[#allocation7 + $0x6ac] sm:$0xff]
    %v514 = vld [vmem:[#allocation7 + $0x6f0] sm:$0xff]
    %v515 = vld [vmem:[#allocation7 + $0x734] sm:$0xff]
    %v516 = vld [vmem:[#allocation7 + $0x778] sm:$0xff]
    %v517 = vld [vmem:[#allocation7 + $0x7bc] sm:$0xff]
    %v518 = vld [vmem:[#allocation7 + $0x800] sm:$0xff]
    %v519 = vld [vmem:[#allocation7 + $0x844] sm:$0xff]
    %v520 = vld [vmem:[#allocation8 + $0x4] sm:$0x3]
    %v521 = vld [vmem:[#allocation7 + $0x10] sm:$0xff]
    %v522 = vld [vmem:[#allocation7 + $0x54] sm:$0xff]
    %v523 = vld [vmem:[#allocation7 + $0x98] sm:$0xff]
    %v524 = vld [vmem:[#allocation7 + $0xdc] sm:$0xff]
    %v525 = vld [vmem:[#allocation7 + $0x120] sm:$0xff]
    %v526 = vld [vmem:[#allocation7 + $0x164] sm:$0xff]
    %v527 = vld [vmem:[#allocation7 + $0x1a8] sm:$0xff]
    %v528 = vld [vmem:[#allocation7 + $0x1ec] sm:$0xff]
    %v529 = vld [vmem:[#allocation7 + $0x230] sm:$0xff]
    %v530 = vld [vmem:[#allocation7 + $0x274] sm:$0xff]
    %v531 = vld [vmem:[#allocation7 + $0x2b8] sm:$0xff]
    %v532 = vld [vmem:[#allocation7 + $0x2fc] sm:$0xff]
    %v533 = vld [vmem:[#allocation7 + $0x340] sm:$0xff]
    %v534 = vld [vmem:[#allocation7 + $0x384] sm:$0xff]
    %v535 = vld [vmem:[#allocation7 + $0x3c8] sm:$0xff]
    %v536 = vld [vmem:[#allocation7 + $0x40c] sm:$0xff]
    %v537 = vld [vmem:[#allocation7 + $0x450] sm:$0xff]
    %v538 = vld [vmem:[#allocation7 + $0x494] sm:$0xff]
    %v539 = vld [vmem:[#allocation7 + $0x4d8] sm:$0xff]
    %v540 = vld [vmem:[#allocation7 + $0x51c] sm:$0xff]
    %v541 = vld [vmem:[#allocation7 + $0x560] sm:$0xff]
    %v542 = vld [vmem:[#allocation7 + $0x5a4] sm:$0xff]
    %v543 = vld [vmem:[#allocation7 + $0x5e8] sm:$0xff]
    %v544 = vld [vmem:[#allocation7 + $0x62c] sm:$0xff]
    %v545 = vld [vmem:[#allocation7 + $0x670] sm:$0xff]
    %v546 = vld [vmem:[#allocation7 + $0x6b4] sm:$0xff]
    %v547 = vld [vmem:[#allocation7 + $0x6f8] sm:$0xff]
    %v548 = vld [vmem:[#allocation7 + $0x73c] sm:$0xff]
    %v549 = vld [vmem:[#allocation7 + $0x780] sm:$0xff]
    %v550 = vld [vmem:[#allocation7 + $0x7c4] sm:$0xff]
    %v551 = vld [vmem:[#allocation7 + $0x808] sm:$0xff]
    %v552 = vld [vmem:[#allocation7 + $0x84c] sm:$0xff]
    %v553 = vld [vmem:[#allocation8 + $0x6] sm:$0x3]
    %v554 = vld [vmem:[#allocation8 + $0x8] sm:$0x3]
    %v555 = vld [vmem:[#allocation8 + $0xa] sm:$0x3]
    %v556 = vpack.c.bf16 %v486, %v484
    %v557 = vpack.c.bf16 %v487, %v485
    %v559 = vlaneseq
    %v560 = vshrl.u32 %v559, 7
    %v561 = vsub.s32 0, %v560
    %v562 = vrot.slane %v520, %v561
    %v563 = vlaneseq
    %v564 = vshrl.u32 %v563, 7
    %v565 = vsub.s32 1, %v564
    %v566 = vrot.slane %v520, %v565
    %v601 = vunpack.c.l.b16 %v488
    %v602 = vunpack.c.h.b16 %v488
    %v603 = vunpack.c.l.b16 %v489
    %v604 = vunpack.c.h.b16 %v489
    %v605 = vunpack.c.l.b16 %v490
    %v606 = vunpack.c.h.b16 %v490
    %v607 = vunpack.c.l.b16 %v491
    %v608 = vunpack.c.h.b16 %v491
    %v609 = vunpack.c.l.b16 %v492
    %v610 = vunpack.c.h.b16 %v492
    %v611 = vunpack.c.l.b16 %v493
    %v612 = vunpack.c.h.b16 %v493
    %v613 = vunpack.c.l.b16 %v494
    %v614 = vunpack.c.h.b16 %v494
    %v615 = vunpack.c.l.b16 %v495
    %v616 = vunpack.c.h.b16 %v495
    %v617 = vunpack.c.l.b16 %v496
    %v618 = vunpack.c.h.b16 %v496
    %v619 = vunpack.c.l.b16 %v497
    %v620 = vunpack.c.h.b16 %v497
    %v621 = vunpack.c.l.b16 %v498
    %v622 = vunpack.c.h.b16 %v498
    %v623 = vunpack.c.l.b16 %v499
    %v624 = vunpack.c.h.b16 %v499
    %v625 = vunpack.c.l.b16 %v500
    %v626 = vunpack.c.h.b16 %v500
    %v627 = vunpack.c.l.b16 %v501
    %v628 = vunpack.c.h.b16 %v501
    %v629 = vunpack.c.l.b16 %v502
    %v630 = vunpack.c.h.b16 %v502
    %v631 = vunpack.c.l.b16 %v503
    %v632 = vunpack.c.h.b16 %v503
    %v633 = vunpack.c.l.b16 %v504
    %v634 = vunpack.c.h.b16 %v504
    %v635 = vunpack.c.l.b16 %v505
    %v636 = vunpack.c.h.b16 %v505
    %v637 = vunpack.c.l.b16 %v506
    %v638 = vunpack.c.h.b16 %v506
    %v639 = vunpack.c.l.b16 %v507
    %v640 = vunpack.c.h.b16 %v507
    %v641 = vunpack.c.l.b16 %v508
    %v642 = vunpack.c.h.b16 %v508
    %v643 = vunpack.c.l.b16 %v509
    %v644 = vunpack.c.h.b16 %v509
    %v645 = vunpack.c.l.b16 %v510
    %v646 = vunpack.c.h.b16 %v510
    %v647 = vunpack.c.l.b16 %v511
    %v648 = vunpack.c.h.b16 %v511
    %v649 = vunpack.c.l.b16 %v512
    %v650 = vunpack.c.h.b16 %v512
    %v651 = vunpack.c.l.b16 %v513
    %v652 = vunpack.c.h.b16 %v513
    %v653 = vunpack.c.l.b16 %v514
    %v654 = vunpack.c.h.b16 %v514
    %v655 = vunpack.c.l.b16 %v515
    %v656 = vunpack.c.h.b16 %v515
    %v657 = vunpack.c.l.b16 %v516
    %v658 = vunpack.c.h.b16 %v516
    %v659 = vunpack.c.l.b16 %v517
    %v660 = vunpack.c.h.b16 %v517
    %v661 = vunpack.c.l.b16 %v518
    %v662 = vunpack.c.h.b16 %v518
    %v663 = vunpack.c.l.b16 %v519
    %v664 = vunpack.c.h.b16 %v519
    %v665 = vpack.c.b16 %v603, %v601
    %v666 = vpack.c.b16 %v604, %v602
    %v667 = vpack.c.b16 %v607, %v605
    %v668 = vpack.c.b16 %v608, %v606
    %v669 = vpack.c.b16 %v611, %v609
    %v670 = vpack.c.b16 %v612, %v610
    %v671 = vpack.c.b16 %v615, %v613
    %v672 = vpack.c.b16 %v616, %v614
    %v673 = vpack.c.b16 %v619, %v617
    %v674 = vpack.c.b16 %v620, %v618
    %v675 = vpack.c.b16 %v623, %v621
    %v676 = vpack.c.b16 %v624, %v622
    %v677 = vpack.c.b16 %v627, %v625
    %v678 = vpack.c.b16 %v628, %v626
    %v679 = vpack.c.b16 %v631, %v629
    %v680 = vpack.c.b16 %v632, %v630
    %v681 = vpack.c.b16 %v635, %v633
    %v682 = vpack.c.b16 %v636, %v634
    %v683 = vpack.c.b16 %v639, %v637
    %v684 = vpack.c.b16 %v640, %v638
    %v685 = vpack.c.b16 %v643, %v641
    %v686 = vpack.c.b16 %v644, %v642
    %v687 = vpack.c.b16 %v647, %v645
    %v688 = vpack.c.b16 %v648, %v646
    %v689 = vpack.c.b16 %v651, %v649
    %v690 = vpack.c.b16 %v652, %v650
    %v691 = vpack.c.b16 %v655, %v653
    %v692 = vpack.c.b16 %v656, %v654
    %v693 = vpack.c.b16 %v659, %v657
    %v694 = vpack.c.b16 %v660, %v658
    %v695 = vpack.c.b16 %v663, %v661
    %v696 = vpack.c.b16 %v664, %v662
    %729 = vmatprep.subr.bf16.mxu0 %v680
    %730 = vmatpush1.bf16.msra.mxu0 %v679
    %731 = vmatprep.subr.bf16.mxu0 %v678
    %732 = vmatpush1.bf16.msra.mxu0 %v677
    %733 = vmatprep.subr.bf16.mxu0 %v676
    %734 = vmatpush1.bf16.msra.mxu0 %v675
    %735 = vmatprep.subr.bf16.mxu0 %v674
    %736 = vmatpush1.bf16.msra.mxu0 %v673
    %737 = vmatprep.subr.bf16.mxu0 %v672
    %738 = vmatpush1.bf16.msra.mxu0 %v671
    %739 = vmatprep.subr.bf16.mxu0 %v670
    %740 = vmatpush1.bf16.msra.mxu0 %v669
    %741 = vmatprep.subr.bf16.mxu0 %v668
    %742 = vmatpush1.bf16.msra.mxu0 %v667
    %743 = vmatprep.subr.bf16.mxu0 %v666
    %744 = vmatpush1.bf16.msra.mxu0 %v665
    %745 = vmatprep.subr.bf16.mxu0 %v696
    %746 = vmatpush2.bf16.msra.mxu0 %v695
    %747 = vmatprep.subr.bf16.mxu0 %v694
    %748 = vmatpush2.bf16.msra.mxu0 %v693
    %749 = vmatprep.subr.bf16.mxu0 %v692
    %750 = vmatpush2.bf16.msra.mxu0 %v691
    %751 = vmatprep.subr.bf16.mxu0 %v690
    %752 = vmatpush2.bf16.msra.mxu0 %v689
    %753 = vmatprep.subr.bf16.mxu0 %v688
    %754 = vmatpush2.bf16.msra.mxu0 %v687
    %755 = vmatprep.subr.bf16.mxu0 %v686
    %756 = vmatpush2.bf16.msra.mxu0 %v685
    %757 = vmatprep.subr.bf16.mxu0 %v684
    %758 = vmatpush2.bf16.msra.mxu0 %v683
    %759 = vmatprep.subr.bf16.mxu0 %v682
    %760 = vmatpush2.bf16.msra.mxu0 %v681
    %761 = vmatprep.mubr.bf16.mxu0 %v557
    %762 = vmatmul.mubr.bf16.gmra.mxu0 %v556
    %v763 = vpop.f32.mrf.mxu0
    %v764 = vadd.f32 %v562, %v763
    %v765 = vpop.f32.mrf.mxu0
    %v766 = vadd.f32 %v566, %v765
    %v767 = vpop.f32.mrf.mxu0
    %v768 = vadd.f32 %v562, %v767
    %v769 = vpop.f32.mrf.mxu0
    %v770 = vadd.f32 %v566, %v769
    %771 = vdwg.mxu0
    %v772 = vmax.f32 %v764, 0.0
    %v773 = vmax.f32 %v766, 0.0
    %v774 = vmax.f32 %v768, 0.0
    %v775 = vmax.f32 %v770, 0.0
    %v776 = vpack.c.bf16 %v774, %v772
    %v777 = vpack.c.bf16 %v775, %v773
    %v779 = vlaneseq
    %v780 = vshrl.u32 %v779, 7
    %v781 = vsub.s32 0, %v780
    %v782 = vrot.slane %v553, %v781
    %v783 = vlaneseq
    %v784 = vshrl.u32 %v783, 7
    %v785 = vsub.s32 1, %v784
    %v786 = vrot.slane %v553, %v785
    %v821 = vunpack.c.l.b16 %v521
    %v822 = vunpack.c.h.b16 %v521
    %v823 = vunpack.c.l.b16 %v522
    %v824 = vunpack.c.h.b16 %v522
    %v825 = vunpack.c.l.b16 %v523
    %v826 = vunpack.c.h.b16 %v523
    %v827 = vunpack.c.l.b16 %v524
    %v828 = vunpack.c.h.b16 %v524
    %v829 = vunpack.c.l.b16 %v525
    %v830 = vunpack.c.h.b16 %v525
    %v831 = vunpack.c.l.b16 %v526
    %v832 = vunpack.c.h.b16 %v526
    %v833 = vunpack.c.l.b16 %v527
    %v834 = vunpack.c.h.b16 %v527
    %v835 = vunpack.c.l.b16 %v528
    %v836 = vunpack.c.h.b16 %v528
    %v837 = vunpack.c.l.b16 %v529
    %v838 = vunpack.c.h.b16 %v529
    %v839 = vunpack.c.l.b16 %v530
    %v840 = vunpack.c.h.b16 %v530
    %v841 = vunpack.c.l.b16 %v531
    %v842 = vunpack.c.h.b16 %v531
    %v843 = vunpack.c.l.b16 %v532
    %v844 = vunpack.c.h.b16 %v532
    %v845 = vunpack.c.l.b16 %v533
    %v846 = vunpack.c.h.b16 %v533
    %v847 = vunpack.c.l.b16 %v534
    %v848 = vunpack.c.h.b16 %v534
    %v849 = vunpack.c.l.b16 %v535
    %v850 = vunpack.c.h.b16 %v535
    %v851 = vunpack.c.l.b16 %v536
    %v852 = vunpack.c.h.b16 %v536
    %v853 = vunpack.c.l.b16 %v537
    %v854 = vunpack.c.h.b16 %v537
    %v855 = vunpack.c.l.b16 %v538
    %v856 = vunpack.c.h.b16 %v538
    %v857 = vunpack.c.l.b16 %v539
    %v858 = vunpack.c.h.b16 %v539
    %v859 = vunpack.c.l.b16 %v540
    %v860 = vunpack.c.h.b16 %v540
    %v861 = vunpack.c.l.b16 %v541
    %v862 = vunpack.c.h.b16 %v541
    %v863 = vunpack.c.l.b16 %v542
    %v864 = vunpack.c.h.b16 %v542
    %v865 = vunpack.c.l.b16 %v543
    %v866 = vunpack.c.h.b16 %v543
    %v867 = vunpack.c.l.b16 %v544
    %v868 = vunpack.c.h.b16 %v544
    %v869 = vunpack.c.l.b16 %v545
    %v870 = vunpack.c.h.b16 %v545
    %v871 = vunpack.c.l.b16 %v546
    %v872 = vunpack.c.h.b16 %v546
    %v873 = vunpack.c.l.b16 %v547
    %v874 = vunpack.c.h.b16 %v547
    %v875 = vunpack.c.l.b16 %v548
    %v876 = vunpack.c.h.b16 %v548
    %v877 = vunpack.c.l.b16 %v549
    %v878 = vunpack.c.h.b16 %v549
    %v879 = vunpack.c.l.b16 %v550
    %v880 = vunpack.c.h.b16 %v550
    %v881 = vunpack.c.l.b16 %v551
    %v882 = vunpack.c.h.b16 %v551
    %v883 = vunpack.c.l.b16 %v552
    %v884 = vunpack.c.h.b16 %v552
    %v885 = vpack.c.b16 %v823, %v821
    %v886 = vpack.c.b16 %v824, %v822
    %v887 = vpack.c.b16 %v827, %v825
    %v888 = vpack.c.b16 %v828, %v826
    %v889 = vpack.c.b16 %v831, %v829
    %v890 = vpack.c.b16 %v832, %v830
    %v891 = vpack.c.b16 %v835, %v833
    %v892 = vpack.c.b16 %v836, %v834
    %v893 = vpack.c.b16 %v839, %v837
    %v894 = vpack.c.b16 %v840, %v838
    %v895 = vpack.c.b16 %v843, %v841
    %v896 = vpack.c.b16 %v844, %v842
    %v897 = vpack.c.b16 %v847, %v845
    %v898 = vpack.c.b16 %v848, %v846
    %v899 = vpack.c.b16 %v851, %v849
    %v900 = vpack.c.b16 %v852, %v850
    %v901 = vpack.c.b16 %v855, %v853
    %v902 = vpack.c.b16 %v856, %v854
    %v903 = vpack.c.b16 %v859, %v857
    %v904 = vpack.c.b16 %v860, %v858
    %v905 = vpack.c.b16 %v863, %v861
    %v906 = vpack.c.b16 %v864, %v862
    %v907 = vpack.c.b16 %v867, %v865
    %v908 = vpack.c.b16 %v868, %v866
    %v909 = vpack.c.b16 %v871, %v869
    %v910 = vpack.c.b16 %v872, %v870
    %v911 = vpack.c.b16 %v875, %v873
    %v912 = vpack.c.b16 %v876, %v874
    %v913 = vpack.c.b16 %v879, %v877
    %v914 = vpack.c.b16 %v880, %v878
    %v915 = vpack.c.b16 %v883, %v881
    %v916 = vpack.c.b16 %v884, %v882
    %949 = vmatprep.subr.bf16.mxu0 %v900
    %950 = vmatpush1.bf16.msra.mxu0 %v899
    %951 = vmatprep.subr.bf16.mxu0 %v898
    %952 = vmatpush1.bf16.msra.mxu0 %v897
    %953 = vmatprep.subr.bf16.mxu0 %v896
    %954 = vmatpush1.bf16.msra.mxu0 %v895
    %955 = vmatprep.subr.bf16.mxu0 %v894
    %956 = vmatpush1.bf16.msra.mxu0 %v893
    %957 = vmatprep.subr.bf16.mxu0 %v892
    %958 = vmatpush1.bf16.msra.mxu0 %v891
    %959 = vmatprep.subr.bf16.mxu0 %v890
    %960 = vmatpush1.bf16.msra.mxu0 %v889
    %961 = vmatprep.subr.bf16.mxu0 %v888
    %962 = vmatpush1.bf16.msra.mxu0 %v887
    %963 = vmatprep.subr.bf16.mxu0 %v886
    %964 = vmatpush1.bf16.msra.mxu0 %v885
    %965 = vmatprep.subr.bf16.mxu0 %v916
    %966 = vmatpush2.bf16.msra.mxu0 %v915
    %967 = vmatprep.subr.bf16.mxu0 %v914
    %968 = vmatpush2.bf16.msra.mxu0 %v913
    %969 = vmatprep.subr.bf16.mxu0 %v912
    %970 = vmatpush2.bf16.msra.mxu0 %v911
    %971 = vmatprep.subr.bf16.mxu0 %v910
    %972 = vmatpush2.bf16.msra.mxu0 %v909
    %973 = vmatprep.subr.bf16.mxu0 %v908
    %974 = vmatpush2.bf16.msra.mxu0 %v907
    %975 = vmatprep.subr.bf16.mxu0 %v906
    %976 = vmatpush2.bf16.msra.mxu0 %v905
    %977 = vmatprep.subr.bf16.mxu0 %v904
    %978 = vmatpush2.bf16.msra.mxu0 %v903
    %979 = vmatprep.subr.bf16.mxu0 %v902
    %980 = vmatpush2.bf16.msra.mxu0 %v901
    %981 = vmatprep.mubr.bf16.mxu0 %v777
    %982 = vmatmul.mubr.bf16.gmra.mxu0 %v776
    %v983 = vpop.f32.mrf.mxu0
    %v984 = vadd.f32 %v782, %v983
    %v985 = vpop.f32.mrf.mxu0
    %v986 = vadd.f32 %v786, %v985
    %v987 = vpop.f32.mrf.mxu0
    %v988 = vadd.f32 %v782, %v987
    %v989 = vpop.f32.mrf.mxu0
    %v990 = vadd.f32 %v786, %v989
    %991 = vdwg.mxu0
    %v992 = vadd.f32 %v984, %v484
    %v993 = vadd.f32 %v986, %v485
    %v994 = vadd.f32 %v988, %v486
    %v995 = vadd.f32 %v990, %v487
    %v996 = vadd.f32 %v992, %v993
    %997 = vadd.xlane.f32.xlu0 %v996
    %v998 = vpop.xlane.xlu0 %997
    %v999 = vadd.f32 %v994, %v995
    %1000 = vadd.xlane.f32.xlu0 %v999
    %v1001 = vpop.xlane.xlu0 %1000
    %v1002 = vrcp.pop 256.0
    %v1003 = vmul.f32 %v998, %v1002
    %v1004 = vmul.f32 %v1001, %v1002
    %v1005 = vsub.f32 %v992, %v1003
    %v1006 = vsub.f32 %v993, %v1003
    %v1007 = vsub.f32 %v994, %v1004
    %v1008 = vsub.f32 %v995, %v1004
    %v1009 = vmul.f32 %v1005, %v1005
    %v1010 = vmul.f32 %v1006, %v1006
    %v1011 = vmul.f32 %v1007, %v1007
    %v1012 = vmul.f32 %v1008, %v1008
    %v1013 = vadd.f32 %v1009, %v1010
    %1014 = vadd.xlane.f32.xlu0 %v1013
    %v1015 = vpop.xlane.xlu0 %1014
    %v1016 = vadd.f32 %v1011, %v1012
    %1017 = vadd.xlane.f32.xlu0 %v1016
    %v1018 = vpop.xlane.xlu0 %1017
    %v1019 = vmul.f32 %v1015, %v1002
    %v1020 = vmul.f32 %v1018, %v1002
    %v1021 = vadd.f32 %v1019, 1e-05
    %v1022 = vadd.f32 %v1020, 1e-05
    %v1023 = vrsqrt.pop %v1021
    %v1024 = vrsqrt.pop %v1022
    %v1025 = vmul.f32 %v1005, %v1023
    %v1026 = vmul.f32 %v1006, %v1023
    %v1027 = vmul.f32 %v1007, %v1024
    %v1028 = vmul.f32 %v1008, %v1024
    %v1030 = vlaneseq
    %v1031 = vshrl.u32 %v1030, 7
    %v1032 = vsub.s32 0, %v1031
    %v1033 = vrot.slane %v554, %v1032
    %v1034 = vlaneseq
    %v1035 = vshrl.u32 %v1034, 7
    %v1036 = vsub.s32 1, %v1035
    %v1037 = vrot.slane %v554, %v1036
    %v1040 = vmul.f32 %v1025, %v1033
    %v1041 = vmul.f32 %v1026, %v1037
    %v1042 = vmul.f32 %v1027, %v1033
    %v1043 = vmul.f32 %v1028, %v1037
    %v1045 = vlaneseq
    %v1046 = vshrl.u32 %v1045, 7
    %v1047 = vsub.s32 0, %v1046
    %v1048 = vrot.slane %v555, %v1047
    %v1049 = vlaneseq
    %v1050 = vshrl.u32 %v1049, 7
    %v1051 = vsub.s32 1, %v1050
    %v1052 = vrot.slane %v555, %v1051
    %v1055 = vadd.f32 %v1040, %v1048
    %v1056 = vadd.f32 %v1041, %v1052
    %v1057 = vadd.f32 %v1042, %v1048
    %v1058 = vadd.f32 %v1043, %v1052
    %v1059 = vmax.f32 %v1055, 0.0
    %v1060 = vmax.f32 %v1056, 0.0
    %v1061 = vmax.f32 %v1057, 0.0
    %v1062 = vmax.f32 %v1058, 0.0
    %v1063 = vld [vmem:[#allocation7 + $0x18] sm:$0xff]
    %v1064 = vld [vmem:[#allocation7 + $0x5c] sm:$0xff]
    %v1065 = vld [vmem:[#allocation7 + $0xa0] sm:$0xff]
    %v1066 = vld [vmem:[#allocation7 + $0xe4] sm:$0xff]
    %v1067 = vld [vmem:[#allocation7 + $0x128] sm:$0xff]
    %v1068 = vld [vmem:[#allocation7 + $0x16c] sm:$0xff]
    %v1069 = vld [vmem:[#allocation7 + $0x1b0] sm:$0xff]
    %v1070 = vld [vmem:[#allocation7 + $0x1f4] sm:$0xff]
    %v1071 = vld [vmem:[#allocation7 + $0x238] sm:$0xff]
    %v1072 = vld [vmem:[#allocation7 + $0x27c] sm:$0xff]
    %v1073 = vld [vmem:[#allocation7 + $0x2c0] sm:$0xff]
    %v1074 = vld [vmem:[#allocation7 + $0x304] sm:$0xff]
    %v1075 = vld [vmem:[#allocation7 + $0x348] sm:$0xff]
    %v1076 = vld [vmem:[#allocation7 + $0x38c] sm:$0xff]
    %v1077 = vld [vmem:[#allocation7 + $0x3d0] sm:$0xff]
    %v1078 = vld [vmem:[#allocation7 + $0x414] sm:$0xff]
    %v1079 = vld [vmem:[#allocation7 + $0x458] sm:$0xff]
    %v1080 = vld [vmem:[#allocation7 + $0x49c] sm:$0xff]
    %v1081 = vld [vmem:[#allocation7 + $0x4e0] sm:$0xff]
    %v1082 = vld [vmem:[#allocation7 + $0x524] sm:$0xff]
    %v1083 = vld [vmem:[#allocation7 + $0x568] sm:$0xff]
    %v1084 = vld [vmem:[#allocation7 + $0x5ac] sm:$0xff]
    %v1085 = vld [vmem:[#allocation7 + $0x5f0] sm:$0xff]
    %v1086 = vld [vmem:[#allocation7 + $0x634] sm:$0xff]
    %v1087 = vld [vmem:[#allocation7 + $0x678] sm:$0xff]
    %v1088 = vld [vmem:[#allocation7 + $0x6bc] sm:$0xff]
    %v1089 = vld [vmem:[#allocation7 + $0x700] sm:$0xff]
    %v1090 = vld [vmem:[#allocation7 + $0x744] sm:$0xff]
    %v1091 = vld [vmem:[#allocation7 + $0x788] sm:$0xff]
    %v1092 = vld [vmem:[#allocation7 + $0x7cc] sm:$0xff]
    %v1093 = vld [vmem:[#allocation7 + $0x810] sm:$0xff]
    %v1094 = vld [vmem:[#allocation7 + $0x854] sm:$0xff]
    %v1095 = vld [vmem:[#allocation8 + $0xc] sm:$0x3]
    %v1096 = vld [vmem:[#allocation7 + $0x20] sm:$0xff]
    %v1097 = vld [vmem:[#allocation7 + $0x64] sm:$0xff]
    %v1098 = vld [vmem:[#allocation7 + $0xa8] sm:$0xff]
    %v1099 = vld [vmem:[#allocation7 + $0xec] sm:$0xff]
    %v1100 = vld [vmem:[#allocation7 + $0x130] sm:$0xff]
    %v1101 = vld [vmem:[#allocation7 + $0x174] sm:$0xff]
    %v1102 = vld [vmem:[#allocation7 + $0x1b8] sm:$0xff]
    %v1103 = vld [vmem:[#allocation7 + $0x1fc] sm:$0xff]
    %v1104 = vld [vmem:[#allocation7 + $0x240] sm:$0xff]
    %v1105 = vld [vmem:[#allocation7 + $0x284] sm:$0xff]
    %v1106 = vld [vmem:[#allocation7 + $0x2c8] sm:$0xff]
    %v1107 = vld [vmem:[#allocation7 + $0x30c] sm:$0xff]
    %v1108 = vld [vmem:[#allocation7 + $0x350] sm:$0xff]
    %v1109 = vld [vmem:[#allocation7 + $0x394] sm:$0xff]
    %v1110 = vld [vmem:[#allocation7 + $0x3d8] sm:$0xff]
    %v1111 = vld [vmem:[#allocation7 + $0x41c] sm:$0xff]
    %v1112 = vld [vmem:[#allocation7 + $0x460] sm:$0xff]
    %v1113 = vld [vmem:[#allocation7 + $0x4a4] sm:$0xff]
    %v1114 = vld [vmem:[#allocation7 + $0x4e8] sm:$0xff]
    %v1115 = vld [vmem:[#allocation7 + $0x52c] sm:$0xff]
    %v1116 = vld [vmem:[#allocation7 + $0x570] sm:$0xff]
    %v1117 = vld [vmem:[#allocation7 + $0x5b4] sm:$0xff]
    %v1118 = vld [vmem:[#allocation7 + $0x5f8] sm:$0xff]
    %v1119 = vld [vmem:[#allocation7 + $0x63c] sm:$0xff]
    %v1120 = vld [vmem:[#allocation7 + $0x680] sm:$0xff]
    %v1121 = vld [vmem:[#allocation7 + $0x6c4] sm:$0xff]
    %v1122 = vld [vmem:[#allocation7 + $0x708] sm:$0xff]
    %v1123 = vld [vmem:[#allocation7 + $0x74c] sm:$0xff]
    %v1124 = vld [vmem:[#allocation7 + $0x790] sm:$0xff]
    %v1125 = vld [vmem:[#allocation7 + $0x7d4] sm:$0xff]
    %v1126 = vld [vmem:[#allocation7 + $0x818] sm:$0xff]
    %v1127 = vld [vmem:[#allocation7 + $0x85c] sm:$0xff]
    %v1128 = vld [vmem:[#allocation8 + $0xe] sm:$0x3]
    %v1129 = vld [vmem:[#allocation8 + $0x10] sm:$0x3]
    %v1130 = vld [vmem:[#allocation8 + $0x12] sm:$0x3]
    %v1131 = vpack.c.bf16 %v1061, %v1059
    %v1132 = vpack.c.bf16 %v1062, %v1060
    %v1134 = vlaneseq
    %v1135 = vshrl.u32 %v1134, 7
    %v1136 = vsub.s32 0, %v1135
    %v1137 = vrot.slane %v1095, %v1136
    %v1138 = vlaneseq
    %v1139 = vshrl.u32 %v1138, 7
    %v1140 = vsub.s32 1, %v1139
    %v1141 = vrot.slane %v1095, %v1140
    %v1176 = vunpack.c.l.b16 %v1063
    %v1177 = vunpack.c.h.b16 %v1063
    %v1178 = vunpack.c.l.b16 %v1064
    %v1179 = vunpack.c.h.b16 %v1064
    %v1180 = vunpack.c.l.b16 %v1065
    %v1181 = vunpack.c.h.b16 %v1065
    %v1182 = vunpack.c.l.b16 %v1066
    %v1183 = vunpack.c.h.b16 %v1066
    %v1184 = vunpack.c.l.b16 %v1067
    %v1185 = vunpack.c.h.b16 %v1067
    %v1186 = vunpack.c.l.b16 %v1068
    %v1187 = vunpack.c.h.b16 %v1068
    %v1188 = vunpack.c.l.b16 %v1069
    %v1189 = vunpack.c.h.b16 %v1069
    %v1190 = vunpack.c.l.b16 %v1070
    %v1191 = vunpack.c.h.b16 %v1070
    %v1192 = vunpack.c.l.b16 %v1071
    %v1193 = vunpack.c.h.b16 %v1071
    %v1194 = vunpack.c.l.b16 %v1072
    %v1195 = vunpack.c.h.b16 %v1072
    %v1196 = vunpack.c.l.b16 %v1073
    %v1197 = vunpack.c.h.b16 %v1073
    %v1198 = vunpack.c.l.b16 %v1074
    %v1199 = vunpack.c.h.b16 %v1074
    %v1200 = vunpack.c.l.b16 %v1075
    %v1201 = vunpack.c.h.b16 %v1075
    %v1202 = vunpack.c.l.b16 %v1076
    %v1203 = vunpack.c.h.b16 %v1076
    %v1204 = vunpack.c.l.b16 %v1077
    %v1205 = vunpack.c.h.b16 %v1077
    %v1206 = vunpack.c.l.b16 %v1078
    %v1207 = vunpack.c.h.b16 %v1078
    %v1208 = vunpack.c.l.b16 %v1079
    %v1209 = vunpack.c.h.b16 %v1079
    %v1210 = vunpack.c.l.b16 %v1080
    %v1211 = vunpack.c.h.b16 %v1080
    %v1212 = vunpack.c.l.b16 %v1081
    %v1213 = vunpack.c.h.b16 %v1081
    %v1214 = vunpack.c.l.b16 %v1082
    %v1215 = vunpack.c.h.b16 %v1082
    %v1216 = vunpack.c.l.b16 %v1083
    %v1217 = vunpack.c.h.b16 %v1083
    %v1218 = vunpack.c.l.b16 %v1084
    %v1219 = vunpack.c.h.b16 %v1084
    %v1220 = vunpack.c.l.b16 %v1085
    %v1221 = vunpack.c.h.b16 %v1085
    %v1222 = vunpack.c.l.b16 %v1086
    %v1223 = vunpack.c.h.b16 %v1086
    %v1224 = vunpack.c.l.b16 %v1087
    %v1225 = vunpack.c.h.b16 %v1087
    %v1226 = vunpack.c.l.b16 %v1088
    %v1227 = vunpack.c.h.b16 %v1088
    %v1228 = vunpack.c.l.b16 %v1089
    %v1229 = vunpack.c.h.b16 %v1089
    %v1230 = vunpack.c.l.b16 %v1090
    %v1231 = vunpack.c.h.b16 %v1090
    %v1232 = vunpack.c.l.b16 %v1091
    %v1233 = vunpack.c.h.b16 %v1091
    %v1234 = vunpack.c.l.b16 %v1092
    %v1235 = vunpack.c.h.b16 %v1092
    %v1236 = vunpack.c.l.b16 %v1093
    %v1237 = vunpack.c.h.b16 %v1093
    %v1238 = vunpack.c.l.b16 %v1094
    %v1239 = vunpack.c.h.b16 %v1094
    %v1240 = vpack.c.b16 %v1178, %v1176
    %v1241 = vpack.c.b16 %v1179, %v1177
    %v1242 = vpack.c.b16 %v1182, %v1180
    %v1243 = vpack.c.b16 %v1183, %v1181
    %v1244 = vpack.c.b16 %v1186, %v1184
    %v1245 = vpack.c.b16 %v1187, %v1185
    %v1246 = vpack.c.b16 %v1190, %v1188
    %v1247 = vpack.c.b16 %v1191, %v1189
    %v1248 = vpack.c.b16 %v1194, %v1192
    %v1249 = vpack.c.b16 %v1195, %v1193
    %v1250 = vpack.c.b16 %v1198, %v1196
    %v1251 = vpack.c.b16 %v1199, %v1197
    %v1252 = vpack.c.b16 %v1202, %v1200
    %v1253 = vpack.c.b16 %v1203, %v1201
    %v1254 = vpack.c.b16 %v1206, %v1204
    %v1255 = vpack.c.b16 %v1207, %v1205
    %v1256 = vpack.c.b16 %v1210, %v1208
    %v1257 = vpack.c.b16 %v1211, %v1209
    %v1258 = vpack.c.b16 %v1214, %v1212
    %v1259 = vpack.c.b16 %v1215, %v1213
    %v1260 = vpack.c.b16 %v1218, %v1216
    %v1261 = vpack.c.b16 %v1219, %v1217
    %v1262 = vpack.c.b16 %v1222, %v1220
    %v1263 = vpack.c.b16 %v1223, %v1221
    %v1264 = vpack.c.b16 %v1226, %v1224
    %v1265 = vpack.c.b16 %v1227, %v1225
    %v1266 = vpack.c.b16 %v1230, %v1228
    %v1267 = vpack.c.b16 %v1231, %v1229
    %v1268 = vpack.c.b16 %v1234, %v1232
    %v1269 = vpack.c.b16 %v1235, %v1233
    %v1270 = vpack.c.b16 %v1238, %v1236
    %v1271 = vpack.c.b16 %v1239, %v1237
    %1304 = vmatprep.subr.bf16.mxu0 %v1255
    %1305 = vmatpush1.bf16.msra.mxu0 %v1254
    %1306 = vmatprep.subr.bf16.mxu0 %v1253
    %1307 = vmatpush1.bf16.msra.mxu0 %v1252
    %1308 = vmatprep.subr.bf16.mxu0 %v1251
    %1309 = vmatpush1.bf16.msra.mxu0 %v1250
    %1310 = vmatprep.subr.bf16.mxu0 %v1249
    %1311 = vmatpush1.bf16.msra.mxu0 %v1248
    %1312 = vmatprep.subr.bf16.mxu0 %v1247
    %1313 = vmatpush1.bf16.msra.mxu0 %v1246
    %1314 = vmatprep.subr.bf16.mxu0 %v1245
    %1315 = vmatpush1.bf16.msra.mxu0 %v1244
    %1316 = vmatprep.subr.bf16.mxu0 %v1243
    %1317 = vmatpush1.bf16.msra.mxu0 %v1242
    %1318 = vmatprep.subr.bf16.mxu0 %v1241
    %1319 = vmatpush1.bf16.msra.mxu0 %v1240
    %1320 = vmatprep.subr.bf16.mxu0 %v1271
    %1321 = vmatpush2.bf16.msra.mxu0 %v1270
    %1322 = vmatprep.subr.bf16.mxu0 %v1269
    %1323 = vmatpush2.bf16.msra.mxu0 %v1268
    %1324 = vmatprep.subr.bf16.mxu0 %v1267
    %1325 = vmatpush2.bf16.msra.mxu0 %v1266
    %1326 = vmatprep.subr.bf16.mxu0 %v1265
    %1327 = vmatpush2.bf16.msra.mxu0 %v1264
    %1328 = vmatprep.subr.bf16.mxu0 %v1263
    %1329 = vmatpush2.bf16.msra.mxu0 %v1262
    %1330 = vmatprep.subr.bf16.mxu0 %v1261
    %1331 = vmatpush2.bf16.msra.mxu0 %v1260
    %1332 = vmatprep.subr.bf16.mxu0 %v1259
    %1333 = vmatpush2.bf16.msra.mxu0 %v1258
    %1334 = vmatprep.subr.bf16.mxu0 %v1257
    %1335 = vmatpush2.bf16.msra.mxu0 %v1256
    %1336 = vmatprep.mubr.bf16.mxu0 %v1132
    %1337 = vmatmul.mubr.bf16.gmra.mxu0 %v1131
    %v1338 = vpop.f32.mrf.mxu0
    %v1339 = vadd.f32 %v1137, %v1338
    %v1340 = vpop.f32.mrf.mxu0
    %v1341 = vadd.f32 %v1141, %v1340
    %v1342 = vpop.f32.mrf.mxu0
    %v1343 = vadd.f32 %v1137, %v1342
    %v1344 = vpop.f32.mrf.mxu0
    %v1345 = vadd.f32 %v1141, %v1344
    %1346 = vdwg.mxu0
    %v1347 = vmax.f32 %v1339, 0.0
    %v1348 = vmax.f32 %v1341, 0.0
    %v1349 = vmax.f32 %v1343, 0.0
    %v1350 = vmax.f32 %v1345, 0.0
    %v1351 = vpack.c.bf16 %v1349, %v1347
    %v1352 = vpack.c.bf16 %v1350, %v1348
    %v1354 = vlaneseq
    %v1355 = vshrl.u32 %v1354, 7
    %v1356 = vsub.s32 0, %v1355
    %v1357 = vrot.slane %v1128, %v1356
    %v1358 = vlaneseq
    %v1359 = vshrl.u32 %v1358, 7
    %v1360 = vsub.s32 1, %v1359
    %v1361 = vrot.slane %v1128, %v1360
    %v1396 = vunpack.c.l.b16 %v1096
    %v1397 = vunpack.c.h.b16 %v1096
    %v1398 = vunpack.c.l.b16 %v1097
    %v1399 = vunpack.c.h.b16 %v1097
    %v1400 = vunpack.c.l.b16 %v1098
    %v1401 = vunpack.c.h.b16 %v1098
    %v1402 = vunpack.c.l.b16 %v1099
    %v1403 = vunpack.c.h.b16 %v1099
    %v1404 = vunpack.c.l.b16 %v1100
    %v1405 = vunpack.c.h.b16 %v1100
    %v1406 = vunpack.c.l.b16 %v1101
    %v1407 = vunpack.c.h.b16 %v1101
    %v1408 = vunpack.c.l.b16 %v1102
    %v1409 = vunpack.c.h.b16 %v1102
    %v1410 = vunpack.c.l.b16 %v1103
    %v1411 = vunpack.c.h.b16 %v1103
    %v1412 = vunpack.c.l.b16 %v1104
    %v1413 = vunpack.c.h.b16 %v1104
    %v1414 = vunpack.c.l.b16 %v1105
    %v1415 = vunpack.c.h.b16 %v1105
    %v1416 = vunpack.c.l.b16 %v1106
    %v1417 = vunpack.c.h.b16 %v1106
    %v1418 = vunpack.c.l.b16 %v1107
    %v1419 = vunpack.c.h.b16 %v1107
    %v1420 = vunpack.c.l.b16 %v1108
    %v1421 = vunpack.c.h.b16 %v1108
    %v1422 = vunpack.c.l.b16 %v1109
    %v1423 = vunpack.c.h.b16 %v1109
    %v1424 = vunpack.c.l.b16 %v1110
    %v1425 = vunpack.c.h.b16 %v1110
    %v1426 = vunpack.c.l.b16 %v1111
    %v1427 = vunpack.c.h.b16 %v1111
    %v1428 = vunpack.c.l.b16 %v1112
    %v1429 = vunpack.c.h.b16 %v1112
    %v1430 = vunpack.c.l.b16 %v1113
    %v1431 = vunpack.c.h.b16 %v1113
    %v1432 = vunpack.c.l.b16 %v1114
    %v1433 = vunpack.c.h.b16 %v1114
    %v1434 = vunpack.c.l.b16 %v1115
    %v1435 = vunpack.c.h.b16 %v1115
    %v1436 = vunpack.c.l.b16 %v1116
    %v1437 = vunpack.c.h.b16 %v1116
    %v1438 = vunpack.c.l.b16 %v1117
    %v1439 = vunpack.c.h.b16 %v1117
    %v1440 = vunpack.c.l.b16 %v1118
    %v1441 = vunpack.c.h.b16 %v1118
    %v1442 = vunpack.c.l.b16 %v1119
    %v1443 = vunpack.c.h.b16 %v1119
    %v1444 = vunpack.c.l.b16 %v1120
    %v1445 = vunpack.c.h.b16 %v1120
    %v1446 = vunpack.c.l.b16 %v1121
    %v1447 = vunpack.c.h.b16 %v1121
    %v1448 = vunpack.c.l.b16 %v1122
    %v1449 = vunpack.c.h.b16 %v1122
    %v1450 = vunpack.c.l.b16 %v1123
    %v1451 = vunpack.c.h.b16 %v1123
    %v1452 = vunpack.c.l.b16 %v1124
    %v1453 = vunpack.c.h.b16 %v1124
    %v1454 = vunpack.c.l.b16 %v1125
    %v1455 = vunpack.c.h.b16 %v1125
    %v1456 = vunpack.c.l.b16 %v1126
    %v1457 = vunpack.c.h.b16 %v1126
    %v1458 = vunpack.c.l.b16 %v1127
    %v1459 = vunpack.c.h.b16 %v1127
    %v1460 = vpack.c.b16 %v1398, %v1396
    %v1461 = vpack.c.b16 %v1399, %v1397
    %v1462 = vpack.c.b16 %v1402, %v1400
    %v1463 = vpack.c.b16 %v1403, %v1401
    %v1464 = vpack.c.b16 %v1406, %v1404
    %v1465 = vpack.c.b16 %v1407, %v1405
    %v1466 = vpack.c.b16 %v1410, %v1408
    %v1467 = vpack.c.b16 %v1411, %v1409
    %v1468 = vpack.c.b16 %v1414, %v1412
    %v1469 = vpack.c.b16 %v1415, %v1413
    %v1470 = vpack.c.b16 %v1418, %v1416
    %v1471 = vpack.c.b16 %v1419, %v1417
    %v1472 = vpack.c.b16 %v1422, %v1420
    %v1473 = vpack.c.b16 %v1423, %v1421
    %v1474 = vpack.c.b16 %v1426, %v1424
    %v1475 = vpack.c.b16 %v1427, %v1425
    %v1476 = vpack.c.b16 %v1430, %v1428
    %v1477 = vpack.c.b16 %v1431, %v1429
    %v1478 = vpack.c.b16 %v1434, %v1432
    %v1479 = vpack.c.b16 %v1435, %v1433
    %v1480 = vpack.c.b16 %v1438, %v1436
    %v1481 = vpack.c.b16 %v1439, %v1437
    %v1482 = vpack.c.b16 %v1442, %v1440
    %v1483 = vpack.c.b16 %v1443, %v1441
    %v1484 = vpack.c.b16 %v1446, %v1444
    %v1485 = vpack.c.b16 %v1447, %v1445
    %v1486 = vpack.c.b16 %v1450, %v1448
    %v1487 = vpack.c.b16 %v1451, %v1449
    %v1488 = vpack.c.b16 %v1454, %v1452
    %v1489 = vpack.c.b16 %v1455, %v1453
    %v1490 = vpack.c.b16 %v1458, %v1456
    %v1491 = vpack.c.b16 %v1459, %v1457
    %1524 = vmatprep.subr.bf16.mxu0 %v1475
    %1525 = vmatpush1.bf16.msra.mxu0 %v1474
    %1526 = vmatprep.subr.bf16.mxu0 %v1473
    %1527 = vmatpush1.bf16.msra.mxu0 %v1472
    %1528 = vmatprep.subr.bf16.mxu0 %v1471
    %1529 = vmatpush1.bf16.msra.mxu0 %v1470
    %1530 = vmatprep.subr.bf16.mxu0 %v1469
    %1531 = vmatpush1.bf16.msra.mxu0 %v1468
    %1532 = vmatprep.subr.bf16.mxu0 %v1467
    %1533 = vmatpush1.bf16.msra.mxu0 %v1466
    %1534 = vmatprep.subr.bf16.mxu0 %v1465
    %1535 = vmatpush1.bf16.msra.mxu0 %v1464
    %1536 = vmatprep.subr.bf16.mxu0 %v1463
    %1537 = vmatpush1.bf16.msra.mxu0 %v1462
    %1538 = vmatprep.subr.bf16.mxu0 %v1461
    %1539 = vmatpush1.bf16.msra.mxu0 %v1460
    %1540 = vmatprep.subr.bf16.mxu0 %v1491
    %1541 = vmatpush2.bf16.msra.mxu0 %v1490
    %1542 = vmatprep.subr.bf16.mxu0 %v1489
    %1543 = vmatpush2.bf16.msra.mxu0 %v1488
    %1544 = vmatprep.subr.bf16.mxu0 %v1487
    %1545 = vmatpush2.bf16.msra.mxu0 %v1486
    %1546 = vmatprep.subr.bf16.mxu0 %v1485
    %1547 = vmatpush2.bf16.msra.mxu0 %v1484
    %1548 = vmatprep.subr.bf16.mxu0 %v1483
    %1549 = vmatpush2.bf16.msra.mxu0 %v1482
    %1550 = vmatprep.subr.bf16.mxu0 %v1481
    %1551 = vmatpush2.bf16.msra.mxu0 %v1480
    %1552 = vmatprep.subr.bf16.mxu0 %v1479
    %1553 = vmatpush2.bf16.msra.mxu0 %v1478
    %1554 = vmatprep.subr.bf16.mxu0 %v1477
    %1555 = vmatpush2.bf16.msra.mxu0 %v1476
    %1556 = vmatprep.mubr.bf16.mxu0 %v1352
    %1557 = vmatmul.mubr.bf16.gmra.mxu0 %v1351
    %v1558 = vpop.f32.mrf.mxu0
    %v1559 = vadd.f32 %v1357, %v1558
    %v1560 = vpop.f32.mrf.mxu0
    %v1561 = vadd.f32 %v1361, %v1560
    %v1562 = vpop.f32.mrf.mxu0
    %v1563 = vadd.f32 %v1357, %v1562
    %v1564 = vpop.f32.mrf.mxu0
    %v1565 = vadd.f32 %v1361, %v1564
    %1566 = vdwg.mxu0
    %v1567 = vadd.f32 %v1559, %v1059
    %v1568 = vadd.f32 %v1561, %v1060
    %v1569 = vadd.f32 %v1563, %v1061
    %v1570 = vadd.f32 %v1565, %v1062
    %v1571 = vadd.f32 %v1567, %v1568
    %1572 = vadd.xlane.f32.xlu0 %v1571
    %v1573 = vpop.xlane.xlu0 %1572
    %v1574 = vadd.f32 %v1569, %v1570
    %1575 = vadd.xlane.f32.xlu0 %v1574
    %v1576 = vpop.xlane.xlu0 %1575
    %v1577 = vmul.f32 %v1573, %v1002
    %v1578 = vmul.f32 %v1576, %v1002
    %v1579 = vsub.f32 %v1567, %v1577
    %v1580 = vsub.f32 %v1568, %v1577
    %v1581 = vsub.f32 %v1569, %v1578
    %v1582 = vsub.f32 %v1570, %v1578
    %v1583 = vmul.f32 %v1579, %v1579
    %v1584 = vmul.f32 %v1580, %v1580
    %v1585 = vmul.f32 %v1581, %v1581
    %v1586 = vmul.f32 %v1582, %v1582
    %v1587 = vadd.f32 %v1583, %v1584
    %1588 = vadd.xlane.f32.xlu0 %v1587
    %v1589 = vpop.xlane.xlu0 %1588
    %v1590 = vadd.f32 %v1585, %v1586
    %1591 = vadd.xlane.f32.xlu0 %v1590
    %v1592 = vpop.xlane.xlu0 %1591
    %v1593 = vmul.f32 %v1589, %v1002
    %v1594 = vmul.f32 %v1592, %v1002
    %v1595 = vadd.f32 %v1593, 1e-05
    %v1596 = vadd.f32 %v1594, 1e-05
    %v1597 = vrsqrt.pop %v1595
    %v1598 = vrsqrt.pop %v1596
    %v1599 = vmul.f32 %v1579, %v1597
    %v1600 = vmul.f32 %v1580, %v1597
    %v1601 = vmul.f32 %v1581, %v1598
    %v1602 = vmul.f32 %v1582, %v1598
    %v1604 = vlaneseq
    %v1605 = vshrl.u32 %v1604, 7
    %v1606 = vsub.s32 0, %v1605
    %v1607 = vrot.slane %v1129, %v1606
    %v1608 = vlaneseq
    %v1609 = vshrl.u32 %v1608, 7
    %v1610 = vsub.s32 1, %v1609
    %v1611 = vrot.slane %v1129, %v1610
    %v1614 = vmul.f32 %v1599, %v1607
    %v1615 = vmul.f32 %v1600, %v1611
    %v1616 = vmul.f32 %v1601, %v1607
    %v1617 = vmul.f32 %v1602, %v1611
    %v1619 = vlaneseq
    %v1620 = vshrl.u32 %v1619, 7
    %v1621 = vsub.s32 0, %v1620
    %v1622 = vrot.slane %v1130, %v1621
    %v1623 = vlaneseq
    %v1624 = vshrl.u32 %v1623, 7
    %v1625 = vsub.s32 1, %v1624
    %v1626 = vrot.slane %v1130, %v1625
    %v1629 = vadd.f32 %v1614, %v1622
    %v1630 = vadd.f32 %v1615, %v1626
    %v1631 = vadd.f32 %v1616, %v1622
    %v1632 = vadd.f32 %v1617, %v1626
    %v1633 = vmax.f32 %v1629, 0.0
    %v1634 = vmax.f32 %v1630, 0.0
    %v1635 = vmax.f32 %v1631, 0.0
    %v1636 = vmax.f32 %v1632, 0.0
    %v1637 = vld [vmem:[#allocation7 + $0x28] sm:$0xff]
    %v1638 = vld [vmem:[#allocation7 + $0x6c] sm:$0xff]
    %v1639 = vld [vmem:[#allocation7 + $0xb0] sm:$0xff]
    %v1640 = vld [vmem:[#allocation7 + $0xf4] sm:$0xff]
    %v1641 = vld [vmem:[#allocation7 + $0x138] sm:$0xff]
    %v1642 = vld [vmem:[#allocation7 + $0x17c] sm:$0xff]
    %v1643 = vld [vmem:[#allocation7 + $0x1c0] sm:$0xff]
    %v1644 = vld [vmem:[#allocation7 + $0x204] sm:$0xff]
    %v1645 = vld [vmem:[#allocation7 + $0x248] sm:$0xff]
    %v1646 = vld [vmem:[#allocation7 + $0x28c] sm:$0xff]
    %v1647 = vld [vmem:[#allocation7 + $0x2d0] sm:$0xff]
    %v1648 = vld [vmem:[#allocation7 + $0x314] sm:$0xff]
    %v1649 = vld [vmem:[#allocation7 + $0x358] sm:$0xff]
    %v1650 = vld [vmem:[#allocation7 + $0x39c] sm:$0xff]
    %v1651 = vld [vmem:[#allocation7 + $0x3e0] sm:$0xff]
    %v1652 = vld [vmem:[#allocation7 + $0x424] sm:$0xff]
    %v1653 = vld [vmem:[#allocation7 + $0x468] sm:$0xff]
    %v1654 = vld [vmem:[#allocation7 + $0x4ac] sm:$0xff]
    %v1655 = vld [vmem:[#allocation7 + $0x4f0] sm:$0xff]
    %v1656 = vld [vmem:[#allocation7 + $0x534] sm:$0xff]
    %v1657 = vld [vmem:[#allocation7 + $0x578] sm:$0xff]
    %v1658 = vld [vmem:[#allocation7 + $0x5bc] sm:$0xff]
    %v1659 = vld [vmem:[#allocation7 + $0x600] sm:$0xff]
    %v1660 = vld [vmem:[#allocation7 + $0x644] sm:$0xff]
    %v1661 = vld [vmem:[#allocation7 + $0x688] sm:$0xff]
    %v1662 = vld [vmem:[#allocation7 + $0x6cc] sm:$0xff]
    %v1663 = vld [vmem:[#allocation7 + $0x710] sm:$0xff]
    %v1664 = vld [vmem:[#allocation7 + $0x754] sm:$0xff]
    %v1665 = vld [vmem:[#allocation7 + $0x798] sm:$0xff]
    %v1666 = vld [vmem:[#allocation7 + $0x7dc] sm:$0xff]
    %v1667 = vld [vmem:[#allocation7 + $0x820] sm:$0xff]
    %v1668 = vld [vmem:[#allocation7 + $0x864] sm:$0xff]
    %v1669 = vld [vmem:[#allocation8 + $0x14] sm:$0x3]
    %v1670 = vld [vmem:[#allocation7 + $0x30] sm:$0xff]
    %v1671 = vld [vmem:[#allocation7 + $0x74] sm:$0xff]
    %v1672 = vld [vmem:[#allocation7 + $0xb8] sm:$0xff]
    %v1673 = vld [vmem:[#allocation7 + $0xfc] sm:$0xff]
    %v1674 = vld [vmem:[#allocation7 + $0x140] sm:$0xff]
    %v1675 = vld [vmem:[#allocation7 + $0x184] sm:$0xff]
    %v1676 = vld [vmem:[#allocation7 + $0x1c8] sm:$0xff]
    %v1677 = vld [vmem:[#allocation7 + $0x20c] sm:$0xff]
    %v1678 = vld [vmem:[#allocation7 + $0x250] sm:$0xff]
    %v1679 = vld [vmem:[#allocation7 + $0x294] sm:$0xff]
    %v1680 = vld [vmem:[#allocation7 + $0x2d8] sm:$0xff]
    %v1681 = vld [vmem:[#allocation7 + $0x31c] sm:$0xff]
    %v1682 = vld [vmem:[#allocation7 + $0x360] sm:$0xff]
    %v1683 = vld [vmem:[#allocation7 + $0x3a4] sm:$0xff]
    %v1684 = vld [vmem:[#allocation7 + $0x3e8] sm:$0xff]
    %v1685 = vld [vmem:[#allocation7 + $0x42c] sm:$0xff]
    %v1686 = vld [vmem:[#allocation7 + $0x470] sm:$0xff]
    %v1687 = vld [vmem:[#allocation7 + $0x4b4] sm:$0xff]
    %v1688 = vld [vmem:[#allocation7 + $0x4f8] sm:$0xff]
    %v1689 = vld [vmem:[#allocation7 + $0x53c] sm:$0xff]
    %v1690 = vld [vmem:[#allocation7 + $0x580] sm:$0xff]
    %v1691 = vld [vmem:[#allocation7 + $0x5c4] sm:$0xff]
    %v1692 = vld [vmem:[#allocation7 + $0x608] sm:$0xff]
    %v1693 = vld [vmem:[#allocation7 + $0x64c] sm:$0xff]
    %v1694 = vld [vmem:[#allocation7 + $0x690] sm:$0xff]
    %v1695 = vld [vmem:[#allocation7 + $0x6d4] sm:$0xff]
    %v1696 = vld [vmem:[#allocation7 + $0x718] sm:$0xff]
    %v1697 = vld [vmem:[#allocation7 + $0x75c] sm:$0xff]
    %v1698 = vld [vmem:[#allocation7 + $0x7a0] sm:$0xff]
    %v1699 = vld [vmem:[#allocation7 + $0x7e4] sm:$0xff]
    %v1700 = vld [vmem:[#allocation7 + $0x828] sm:$0xff]
    %v1701 = vld [vmem:[#allocation7 + $0x86c] sm:$0xff]
    %v1702 = vld [vmem:[#allocation8 + $0x16] sm:$0x3]
    %v1703 = vld [vmem:[#allocation8 + $0x18] sm:$0x3]
    %v1704 = vld [vmem:[#allocation8 + $0x1a] sm:$0x3]
    %v1705 = vpack.c.bf16 %v1635, %v1633
    %v1706 = vpack.c.bf16 %v1636, %v1634
    %v1708 = vlaneseq
    %v1709 = vshrl.u32 %v1708, 7
    %v1710 = vsub.s32 0, %v1709
    %v1711 = vrot.slane %v1669, %v1710
    %v1712 = vlaneseq
    %v1713 = vshrl.u32 %v1712, 7
    %v1714 = vsub.s32 1, %v1713
    %v1715 = vrot.slane %v1669, %v1714
    %v1750 = vunpack.c.l.b16 %v1637
    %v1751 = vunpack.c.h.b16 %v1637
    %v1752 = vunpack.c.l.b16 %v1638
    %v1753 = vunpack.c.h.b16 %v1638
    %v1754 = vunpack.c.l.b16 %v1639
    %v1755 = vunpack.c.h.b16 %v1639
    %v1756 = vunpack.c.l.b16 %v1640
    %v1757 = vunpack.c.h.b16 %v1640
    %v1758 = vunpack.c.l.b16 %v1641
    %v1759 = vunpack.c.h.b16 %v1641
    %v1760 = vunpack.c.l.b16 %v1642
    %v1761 = vunpack.c.h.b16 %v1642
    %v1762 = vunpack.c.l.b16 %v1643
    %v1763 = vunpack.c.h.b16 %v1643
    %v1764 = vunpack.c.l.b16 %v1644
    %v1765 = vunpack.c.h.b16 %v1644
    %v1766 = vunpack.c.l.b16 %v1645
    %v1767 = vunpack.c.h.b16 %v1645
    %v1768 = vunpack.c.l.b16 %v1646
    %v1769 = vunpack.c.h.b16 %v1646
    %v1770 = vunpack.c.l.b16 %v1647
    %v1771 = vunpack.c.h.b16 %v1647
    %v1772 = vunpack.c.l.b16 %v1648
    %v1773 = vunpack.c.h.b16 %v1648
    %v1774 = vunpack.c.l.b16 %v1649
    %v1775 = vunpack.c.h.b16 %v1649
    %v1776 = vunpack.c.l.b16 %v1650
    %v1777 = vunpack.c.h.b16 %v1650
    %v1778 = vunpack.c.l.b16 %v1651
    %v1779 = vunpack.c.h.b16 %v1651
    %v1780 = vunpack.c.l.b16 %v1652
    %v1781 = vunpack.c.h.b16 %v1652
    %v1782 = vunpack.c.l.b16 %v1653
    %v1783 = vunpack.c.h.b16 %v1653
    %v1784 = vunpack.c.l.b16 %v1654
    %v1785 = vunpack.c.h.b16 %v1654
    %v1786 = vunpack.c.l.b16 %v1655
    %v1787 = vunpack.c.h.b16 %v1655
    %v1788 = vunpack.c.l.b16 %v1656
    %v1789 = vunpack.c.h.b16 %v1656
    %v1790 = vunpack.c.l.b16 %v1657
    %v1791 = vunpack.c.h.b16 %v1657
    %v1792 = vunpack.c.l.b16 %v1658
    %v1793 = vunpack.c.h.b16 %v1658
    %v1794 = vunpack.c.l.b16 %v1659
    %v1795 = vunpack.c.h.b16 %v1659
    %v1796 = vunpack.c.l.b16 %v1660
    %v1797 = vunpack.c.h.b16 %v1660
    %v1798 = vunpack.c.l.b16 %v1661
    %v1799 = vunpack.c.h.b16 %v1661
    %v1800 = vunpack.c.l.b16 %v1662
    %v1801 = vunpack.c.h.b16 %v1662
    %v1802 = vunpack.c.l.b16 %v1663
    %v1803 = vunpack.c.h.b16 %v1663
    %v1804 = vunpack.c.l.b16 %v1664
    %v1805 = vunpack.c.h.b16 %v1664
    %v1806 = vunpack.c.l.b16 %v1665
    %v1807 = vunpack.c.h.b16 %v1665
    %v1808 = vunpack.c.l.b16 %v1666
    %v1809 = vunpack.c.h.b16 %v1666
    %v1810 = vunpack.c.l.b16 %v1667
    %v1811 = vunpack.c.h.b16 %v1667
    %v1812 = vunpack.c.l.b16 %v1668
    %v1813 = vunpack.c.h.b16 %v1668
    %v1814 = vpack.c.b16 %v1752, %v1750
    %v1815 = vpack.c.b16 %v1753, %v1751
    %v1816 = vpack.c.b16 %v1756, %v1754
    %v1817 = vpack.c.b16 %v1757, %v1755
    %v1818 = vpack.c.b16 %v1760, %v1758
    %v1819 = vpack.c.b16 %v1761, %v1759
    %v1820 = vpack.c.b16 %v1764, %v1762
    %v1821 = vpack.c.b16 %v1765, %v1763
    %v1822 = vpack.c.b16 %v1768, %v1766
    %v1823 = vpack.c.b16 %v1769, %v1767
    %v1824 = vpack.c.b16 %v1772, %v1770
    %v1825 = vpack.c.b16 %v1773, %v1771
    %v1826 = vpack.c.b16 %v1776, %v1774
    %v1827 = vpack.c.b16 %v1777, %v1775
    %v1828 = vpack.c.b16 %v1780, %v1778
    %v1829 = vpack.c.b16 %v1781, %v1779
    %v1830 = vpack.c.b16 %v1784, %v1782
    %v1831 = vpack.c.b16 %v1785, %v1783
    %v1832 = vpack.c.b16 %v1788, %v1786
    %v1833 = vpack.c.b16 %v1789, %v1787
    %v1834 = vpack.c.b16 %v1792, %v1790
    %v1835 = vpack.c.b16 %v1793, %v1791
    %v1836 = vpack.c.b16 %v1796, %v1794
    %v1837 = vpack.c.b16 %v1797, %v1795
    %v1838 = vpack.c.b16 %v1800, %v1798
    %v1839 = vpack.c.b16 %v1801, %v1799
    %v1840 = vpack.c.b16 %v1804, %v1802
    %v1841 = vpack.c.b16 %v1805, %v1803
    %v1842 = vpack.c.b16 %v1808, %v1806
    %v1843 = vpack.c.b16 %v1809, %v1807
    %v1844 = vpack.c.b16 %v1812, %v1810
    %v1845 = vpack.c.b16 %v1813, %v1811
    %1878 = vmatprep.subr.bf16.mxu0 %v1829
    %1879 = vmatpush1.bf16.msra.mxu0 %v1828
    %1880 = vmatprep.subr.bf16.mxu0 %v1827
    %1881 = vmatpush1.bf16.msra.mxu0 %v1826
    %1882 = vmatprep.subr.bf16.mxu0 %v1825
    %1883 = vmatpush1.bf16.msra.mxu0 %v1824
    %1884 = vmatprep.subr.bf16.mxu0 %v1823
    %1885 = vmatpush1.bf16.msra.mxu0 %v1822
    %1886 = vmatprep.subr.bf16.mxu0 %v1821
    %1887 = vmatpush1.bf16.msra.mxu0 %v1820
    %1888 = vmatprep.subr.bf16.mxu0 %v1819
    %1889 = vmatpush1.bf16.msra.mxu0 %v1818
    %1890 = vmatprep.subr.bf16.mxu0 %v1817
    %1891 = vmatpush1.bf16.msra.mxu0 %v1816
    %1892 = vmatprep.subr.bf16.mxu0 %v1815
    %1893 = vmatpush1.bf16.msra.mxu0 %v1814
    %1894 = vmatprep.subr.bf16.mxu0 %v1845
    %1895 = vmatpush2.bf16.msra.mxu0 %v1844
    %1896 = vmatprep.subr.bf16.mxu0 %v1843
    %1897 = vmatpush2.bf16.msra.mxu0 %v1842
    %1898 = vmatprep.subr.bf16.mxu0 %v1841
    %1899 = vmatpush2.bf16.msra.mxu0 %v1840
    %1900 = vmatprep.subr.bf16.mxu0 %v1839
    %1901 = vmatpush2.bf16.msra.mxu0 %v1838
    %1902 = vmatprep.subr.bf16.mxu0 %v1837
    %1903 = vmatpush2.bf16.msra.mxu0 %v1836
    %1904 = vmatprep.subr.bf16.mxu0 %v1835
    %1905 = vmatpush2.bf16.msra.mxu0 %v1834
    %1906 = vmatprep.subr.bf16.mxu0 %v1833
    %1907 = vmatpush2.bf16.msra.mxu0 %v1832
    %1908 = vmatprep.subr.bf16.mxu0 %v1831
    %1909 = vmatpush2.bf16.msra.mxu0 %v1830
    %1910 = vmatprep.mubr.bf16.mxu0 %v1706
    %1911 = vmatmul.mubr.bf16.gmra.mxu0 %v1705
    %v1912 = vpop.f32.mrf.mxu0
    %v1913 = vadd.f32 %v1711, %v1912
    %v1914 = vpop.f32.mrf.mxu0
    %v1915 = vadd.f32 %v1715, %v1914
    %v1916 = vpop.f32.mrf.mxu0
    %v1917 = vadd.f32 %v1711, %v1916
    %v1918 = vpop.f32.mrf.mxu0
    %v1919 = vadd.f32 %v1715, %v1918
    %1920 = vdwg.mxu0
    %v1921 = vmax.f32 %v1913, 0.0
    %v1922 = vmax.f32 %v1915, 0.0
    %v1923 = vmax.f32 %v1917, 0.0
    %v1924 = vmax.f32 %v1919, 0.0
    %v1925 = vpack.c.bf16 %v1923, %v1921
    %v1926 = vpack.c.bf16 %v1924, %v1922
    %v1928 = vlaneseq
    %v1929 = vshrl.u32 %v1928, 7
    %v1930 = vsub.s32 0, %v1929
    %v1931 = vrot.slane %v1702, %v1930
    %v1932 = vlaneseq
    %v1933 = vshrl.u32 %v1932, 7
    %v1934 = vsub.s32 1, %v1933
    %v1935 = vrot.slane %v1702, %v1934
    %v1970 = vunpack.c.l.b16 %v1670
    %v1971 = vunpack.c.h.b16 %v1670
    %v1972 = vunpack.c.l.b16 %v1671
    %v1973 = vunpack.c.h.b16 %v1671
    %v1974 = vunpack.c.l.b16 %v1672
    %v1975 = vunpack.c.h.b16 %v1672
    %v1976 = vunpack.c.l.b16 %v1673
    %v1977 = vunpack.c.h.b16 %v1673
    %v1978 = vunpack.c.l.b16 %v1674
    %v1979 = vunpack.c.h.b16 %v1674
    %v1980 = vunpack.c.l.b16 %v1675
    %v1981 = vunpack.c.h.b16 %v1675
    %v1982 = vunpack.c.l.b16 %v1676
    %v1983 = vunpack.c.h.b16 %v1676
    %v1984 = vunpack.c.l.b16 %v1677
    %v1985 = vunpack.c.h.b16 %v1677
    %v1986 = vunpack.c.l.b16 %v1678
    %v1987 = vunpack.c.h.b16 %v1678
    %v1988 = vunpack.c.l.b16 %v1679
    %v1989 = vunpack.c.h.b16 %v1679
    %v1990 = vunpack.c.l.b16 %v1680
    %v1991 = vunpack.c.h.b16 %v1680
    %v1992 = vunpack.c.l.b16 %v1681
    %v1993 = vunpack.c.h.b16 %v1681
    %v1994 = vunpack.c.l.b16 %v1682
    %v1995 = vunpack.c.h.b16 %v1682
    %v1996 = vunpack.c.l.b16 %v1683
    %v1997 = vunpack.c.h.b16 %v1683
    %v1998 = vunpack.c.l.b16 %v1684
    %v1999 = vunpack.c.h.b16 %v1684
    %v2000 = vunpack.c.l.b16 %v1685
    %v2001 = vunpack.c.h.b16 %v1685
    %v2002 = vunpack.c.l.b16 %v1686
    %v2003 = vunpack.c.h.b16 %v1686
    %v2004 = vunpack.c.l.b16 %v1687
    %v2005 = vunpack.c.h.b16 %v1687
    %v2006 = vunpack.c.l.b16 %v1688
    %v2007 = vunpack.c.h.b16 %v1688
    %v2008 = vunpack.c.l.b16 %v1689
    %v2009 = vunpack.c.h.b16 %v1689
    %v2010 = vunpack.c.l.b16 %v1690
    %v2011 = vunpack.c.h.b16 %v1690
    %v2012 = vunpack.c.l.b16 %v1691
    %v2013 = vunpack.c.h.b16 %v1691
    %v2014 = vunpack.c.l.b16 %v1692
    %v2015 = vunpack.c.h.b16 %v1692
    %v2016 = vunpack.c.l.b16 %v1693
    %v2017 = vunpack.c.h.b16 %v1693
    %v2018 = vunpack.c.l.b16 %v1694
    %v2019 = vunpack.c.h.b16 %v1694
    %v2020 = vunpack.c.l.b16 %v1695
    %v2021 = vunpack.c.h.b16 %v1695
    %v2022 = vunpack.c.l.b16 %v1696
    %v2023 = vunpack.c.h.b16 %v1696
    %v2024 = vunpack.c.l.b16 %v1697
    %v2025 = vunpack.c.h.b16 %v1697
    %v2026 = vunpack.c.l.b16 %v1698
    %v2027 = vunpack.c.h.b16 %v1698
    %v2028 = vunpack.c.l.b16 %v1699
    %v2029 = vunpack.c.h.b16 %v1699
    %v2030 = vunpack.c.l.b16 %v1700
    %v2031 = vunpack.c.h.b16 %v1700
    %v2032 = vunpack.c.l.b16 %v1701
    %v2033 = vunpack.c.h.b16 %v1701
    %v2034 = vpack.c.b16 %v1972, %v1970
    %v2035 = vpack.c.b16 %v1973, %v1971
    %v2036 = vpack.c.b16 %v1976, %v1974
    %v2037 = vpack.c.b16 %v1977, %v1975
    %v2038 = vpack.c.b16 %v1980, %v1978
    %v2039 = vpack.c.b16 %v1981, %v1979
    %v2040 = vpack.c.b16 %v1984, %v1982
    %v2041 = vpack.c.b16 %v1985, %v1983
    %v2042 = vpack.c.b16 %v1988, %v1986
    %v2043 = vpack.c.b16 %v1989, %v1987
    %v2044 = vpack.c.b16 %v1992, %v1990
    %v2045 = vpack.c.b16 %v1993, %v1991
    %v2046 = vpack.c.b16 %v1996, %v1994
    %v2047 = vpack.c.b16 %v1997, %v1995
    %v2048 = vpack.c.b16 %v2000, %v1998
    %v2049 = vpack.c.b16 %v2001, %v1999
    %v2050 = vpack.c.b16 %v2004, %v2002
    %v2051 = vpack.c.b16 %v2005, %v2003
    %v2052 = vpack.c.b16 %v2008, %v2006
    %v2053 = vpack.c.b16 %v2009, %v2007
    %v2054 = vpack.c.b16 %v2012, %v2010
    %v2055 = vpack.c.b16 %v2013, %v2011
    %v2056 = vpack.c.b16 %v2016, %v2014
    %v2057 = vpack.c.b16 %v2017, %v2015
    %v2058 = vpack.c.b16 %v2020, %v2018
    %v2059 = vpack.c.b16 %v2021, %v2019
    %v2060 = vpack.c.b16 %v2024, %v2022
    %v2061 = vpack.c.b16 %v2025, %v2023
    %v2062 = vpack.c.b16 %v2028, %v2026
    %v2063 = vpack.c.b16 %v2029, %v2027
    %v2064 = vpack.c.b16 %v2032, %v2030
    %v2065 = vpack.c.b16 %v2033, %v2031
    %2098 = vmatprep.subr.bf16.mxu0 %v2049
    %2099 = vmatpush1.bf16.msra.mxu0 %v2048
    %2100 = vmatprep.subr.bf16.mxu0 %v2047
    %2101 = vmatpush1.bf16.msra.mxu0 %v2046
    %2102 = vmatprep.subr.bf16.mxu0 %v2045
    %2103 = vmatpush1.bf16.msra.mxu0 %v2044
    %2104 = vmatprep.subr.bf16.mxu0 %v2043
    %2105 = vmatpush1.bf16.msra.mxu0 %v2042
    %2106 = vmatprep.subr.bf16.mxu0 %v2041
    %2107 = vmatpush1.bf16.msra.mxu0 %v2040
    %2108 = vmatprep.subr.bf16.mxu0 %v2039
    %2109 = vmatpush1.bf16.msra.mxu0 %v2038
    %2110 = vmatprep.subr.bf16.mxu0 %v2037
    %2111 = vmatpush1.bf16.msra.mxu0 %v2036
    %2112 = vmatprep.subr.bf16.mxu0 %v2035
    %2113 = vmatpush1.bf16.msra.mxu0 %v2034
    %2114 = vmatprep.subr.bf16.mxu0 %v2065
    %2115 = vmatpush2.bf16.msra.mxu0 %v2064
    %2116 = vmatprep.subr.bf16.mxu0 %v2063
    %2117 = vmatpush2.bf16.msra.mxu0 %v2062
    %2118 = vmatprep.subr.bf16.mxu0 %v2061
    %2119 = vmatpush2.bf16.msra.mxu0 %v2060
    %2120 = vmatprep.subr.bf16.mxu0 %v2059
    %2121 = vmatpush2.bf16.msra.mxu0 %v2058
    %2122 = vmatprep.subr.bf16.mxu0 %v2057
    %2123 = vmatpush2.bf16.msra.mxu0 %v2056
    %2124 = vmatprep.subr.bf16.mxu0 %v2055
    %2125 = vmatpush2.bf16.msra.mxu0 %v2054
    %2126 = vmatprep.subr.bf16.mxu0 %v2053
    %2127 = vmatpush2.bf16.msra.mxu0 %v2052
    %2128 = vmatprep.subr.bf16.mxu0 %v2051
    %2129 = vmatpush2.bf16.msra.mxu0 %v2050
    %2130 = vmatprep.mubr.bf16.mxu0 %v1926
    %2131 = vmatmul.mubr.bf16.gmra.mxu0 %v1925
    %v2132 = vpop.f32.mrf.mxu0
    %v2133 = vadd.f32 %v1931, %v2132
    %v2134 = vpop.f32.mrf.mxu0
    %v2135 = vadd.f32 %v1935, %v2134
    %v2136 = vpop.f32.mrf.mxu0
    %v2137 = vadd.f32 %v1931, %v2136
    %v2138 = vpop.f32.mrf.mxu0
    %v2139 = vadd.f32 %v1935, %v2138
    %2140 = vdwg.mxu0
    %v2141 = vadd.f32 %v2133, %v1633
    %v2142 = vadd.f32 %v2135, %v1634
    %v2143 = vadd.f32 %v2137, %v1635
    %v2144 = vadd.f32 %v2139, %v1636
    %v2145 = vadd.f32 %v2141, %v2142
    %2146 = vadd.xlane.f32.xlu0 %v2145
    %v2147 = vpop.xlane.xlu0 %2146
    %v2148 = vadd.f32 %v2143, %v2144
    %2149 = vadd.xlane.f32.xlu0 %v2148
    %v2150 = vpop.xlane.xlu0 %2149
    %v2151 = vmul.f32 %v2147, %v1002
    %v2152 = vmul.f32 %v2150, %v1002
    %v2153 = vsub.f32 %v2141, %v2151
    %v2154 = vsub.f32 %v2142, %v2151
    %v2155 = vsub.f32 %v2143, %v2152
    %v2156 = vsub.f32 %v2144, %v2152
    %v2157 = vmul.f32 %v2153, %v2153
    %v2158 = vmul.f32 %v2154, %v2154
    %v2159 = vmul.f32 %v2155, %v2155
    %v2160 = vmul.f32 %v2156, %v2156
    %v2161 = vadd.f32 %v2157, %v2158
    %2162 = vadd.xlane.f32.xlu0 %v2161
    %v2163 = vpop.xlane.xlu0 %2162
    %v2164 = vadd.f32 %v2159, %v2160
    %2165 = vadd.xlane.f32.xlu0 %v2164
    %v2166 = vpop.xlane.xlu0 %2165
    %v2167 = vmul.f32 %v2163, %v1002
    %v2168 = vmul.f32 %v2166, %v1002
    %v2169 = vadd.f32 %v2167, 1e-05
    %v2170 = vadd.f32 %v2168, 1e-05
    %v2171 = vrsqrt.pop %v2169
    %v2172 = vrsqrt.pop %v2170
    %v2173 = vmul.f32 %v2153, %v2171
    %v2174 = vmul.f32 %v2154, %v2171
    %v2175 = vmul.f32 %v2155, %v2172
    %v2176 = vmul.f32 %v2156, %v2172
    %v2178 = vlaneseq
    %v2179 = vshrl.u32 %v2178, 7
    %v2180 = vsub.s32 0, %v2179
    %v2181 = vrot.slane %v1703, %v2180
    %v2182 = vlaneseq
    %v2183 = vshrl.u32 %v2182, 7
    %v2184 = vsub.s32 1, %v2183
    %v2185 = vrot.slane %v1703, %v2184
    %v2188 = vmul.f32 %v2173, %v2181
    %v2189 = vmul.f32 %v2174, %v2185
    %v2190 = vmul.f32 %v2175, %v2181
    %v2191 = vmul.f32 %v2176, %v2185
    %v2193 = vlaneseq
    %v2194 = vshrl.u32 %v2193, 7
    %v2195 = vsub.s32 0, %v2194
    %v2196 = vrot.slane %v1704, %v2195
    %v2197 = vlaneseq
    %v2198 = vshrl.u32 %v2197, 7
    %v2199 = vsub.s32 1, %v2198
    %v2200 = vrot.slane %v1704, %v2199
    %v2203 = vadd.f32 %v2188, %v2196
    %v2204 = vadd.f32 %v2189, %v2200
    %v2205 = vadd.f32 %v2190, %v2196
    %v2206 = vadd.f32 %v2191, %v2200
    %v2207 = vmax.f32 %v2203, 0.0
    %v2208 = vmax.f32 %v2204, 0.0
    %v2209 = vmax.f32 %v2205, 0.0
    %v2210 = vmax.f32 %v2206, 0.0
    %v2211 = vld [vmem:[#allocation7 + $0x38] sm:$0xff]
    %v2212 = vld [vmem:[#allocation7 + $0x7c] sm:$0xff]
    %v2213 = vld [vmem:[#allocation7 + $0xc0] sm:$0xff]
    %v2214 = vld [vmem:[#allocation7 + $0x104] sm:$0xff]
    %v2215 = vld [vmem:[#allocation7 + $0x148] sm:$0xff]
    %v2216 = vld [vmem:[#allocation7 + $0x18c] sm:$0xff]
    %v2217 = vld [vmem:[#allocation7 + $0x1d0] sm:$0xff]
    %v2218 = vld [vmem:[#allocation7 + $0x214] sm:$0xff]
    %v2219 = vld [vmem:[#allocation7 + $0x258] sm:$0xff]
    %v2220 = vld [vmem:[#allocation7 + $0x29c] sm:$0xff]
    %v2221 = vld [vmem:[#allocation7 + $0x2e0] sm:$0xff]
    %v2222 = vld [vmem:[#allocation7 + $0x324] sm:$0xff]
    %v2223 = vld [vmem:[#allocation7 + $0x368] sm:$0xff]
    %v2224 = vld [vmem:[#allocation7 + $0x3ac] sm:$0xff]
    %v2225 = vld [vmem:[#allocation7 + $0x3f0] sm:$0xff]
    %v2226 = vld [vmem:[#allocation7 + $0x434] sm:$0xff]
    %v2227 = vld [vmem:[#allocation7 + $0x478] sm:$0xff]
    %v2228 = vld [vmem:[#allocation7 + $0x4bc] sm:$0xff]
    %v2229 = vld [vmem:[#allocation7 + $0x500] sm:$0xff]
    %v2230 = vld [vmem:[#allocation7 + $0x544] sm:$0xff]
    %v2231 = vld [vmem:[#allocation7 + $0x588] sm:$0xff]
    %v2232 = vld [vmem:[#allocation7 + $0x5cc] sm:$0xff]
    %v2233 = vld [vmem:[#allocation7 + $0x610] sm:$0xff]
    %v2234 = vld [vmem:[#allocation7 + $0x654] sm:$0xff]
    %v2235 = vld [vmem:[#allocation7 + $0x698] sm:$0xff]
    %v2236 = vld [vmem:[#allocation7 + $0x6dc] sm:$0xff]
    %v2237 = vld [vmem:[#allocation7 + $0x720] sm:$0xff]
    %v2238 = vld [vmem:[#allocation7 + $0x764] sm:$0xff]
    %v2239 = vld [vmem:[#allocation7 + $0x7a8] sm:$0xff]
    %v2240 = vld [vmem:[#allocation7 + $0x7ec] sm:$0xff]
    %v2241 = vld [vmem:[#allocation7 + $0x830] sm:$0xff]
    %v2242 = vld [vmem:[#allocation7 + $0x874] sm:$0xff]
    %v2243 = vld [vmem:[#allocation8 + $0x1c] sm:$0x3]
    %v2244 = vpack.c.bf16 %v2209, %v2207
    %v2245 = vpack.c.bf16 %v2210, %v2208
    %v2247 = vlaneseq
    %v2248 = vshrl.u32 %v2247, 7
    %v2249 = vsub.s32 0, %v2248
    %v2250 = vrot.slane %v2243, %v2249
    %v2251 = vlaneseq
    %v2252 = vshrl.u32 %v2251, 7
    %v2253 = vsub.s32 1, %v2252
    %v2254 = vrot.slane %v2243, %v2253
    %v2289 = vunpack.c.l.b16 %v2211
    %v2290 = vunpack.c.h.b16 %v2211
    %v2291 = vunpack.c.l.b16 %v2212
    %v2292 = vunpack.c.h.b16 %v2212
    %v2293 = vunpack.c.l.b16 %v2213
    %v2294 = vunpack.c.h.b16 %v2213
    %v2295 = vunpack.c.l.b16 %v2214
    %v2296 = vunpack.c.h.b16 %v2214
    %v2297 = vunpack.c.l.b16 %v2215
    %v2298 = vunpack.c.h.b16 %v2215
    %v2299 = vunpack.c.l.b16 %v2216
    %v2300 = vunpack.c.h.b16 %v2216
    %v2301 = vunpack.c.l.b16 %v2217
    %v2302 = vunpack.c.h.b16 %v2217
    %v2303 = vunpack.c.l.b16 %v2218
    %v2304 = vunpack.c.h.b16 %v2218
    %v2305 = vunpack.c.l.b16 %v2219
    %v2306 = vunpack.c.h.b16 %v2219
    %v2307 = vunpack.c.l.b16 %v2220
    %v2308 = vunpack.c.h.b16 %v2220
    %v2309 = vunpack.c.l.b16 %v2221
    %v2310 = vunpack.c.h.b16 %v2221
    %v2311 = vunpack.c.l.b16 %v2222
    %v2312 = vunpack.c.h.b16 %v2222
    %v2313 = vunpack.c.l.b16 %v2223
    %v2314 = vunpack.c.h.b16 %v2223
    %v2315 = vunpack.c.l.b16 %v2224
    %v2316 = vunpack.c.h.b16 %v2224
    %v2317 = vunpack.c.l.b16 %v2225
    %v2318 = vunpack.c.h.b16 %v2225
    %v2319 = vunpack.c.l.b16 %v2226
    %v2320 = vunpack.c.h.b16 %v2226
    %v2321 = vunpack.c.l.b16 %v2227
    %v2322 = vunpack.c.h.b16 %v2227
    %v2323 = vunpack.c.l.b16 %v2228
    %v2324 = vunpack.c.h.b16 %v2228
    %v2325 = vunpack.c.l.b16 %v2229
    %v2326 = vunpack.c.h.b16 %v2229
    %v2327 = vunpack.c.l.b16 %v2230
    %v2328 = vunpack.c.h.b16 %v2230
    %v2329 = vunpack.c.l.b16 %v2231
    %v2330 = vunpack.c.h.b16 %v2231
    %v2331 = vunpack.c.l.b16 %v2232
    %v2332 = vunpack.c.h.b16 %v2232
    %v2333 = vunpack.c.l.b16 %v2233
    %v2334 = vunpack.c.h.b16 %v2233
    %v2335 = vunpack.c.l.b16 %v2234
    %v2336 = vunpack.c.h.b16 %v2234
    %v2337 = vunpack.c.l.b16 %v2235
    %v2338 = vunpack.c.h.b16 %v2235
    %v2339 = vunpack.c.l.b16 %v2236
    %v2340 = vunpack.c.h.b16 %v2236
    %v2341 = vunpack.c.l.b16 %v2237
    %v2342 = vunpack.c.h.b16 %v2237
    %v2343 = vunpack.c.l.b16 %v2238
    %v2344 = vunpack.c.h.b16 %v2238
    %v2345 = vunpack.c.l.b16 %v2239
    %v2346 = vunpack.c.h.b16 %v2239
    %v2347 = vunpack.c.l.b16 %v2240
    %v2348 = vunpack.c.h.b16 %v2240
    %v2349 = vunpack.c.l.b16 %v2241
    %v2350 = vunpack.c.h.b16 %v2241
    %v2351 = vunpack.c.l.b16 %v2242
    %v2352 = vunpack.c.h.b16 %v2242
    %v2353 = vpack.c.b16 %v2291, %v2289
    %v2354 = vpack.c.b16 %v2292, %v2290
    %v2355 = vpack.c.b16 %v2295, %v2293
    %v2356 = vpack.c.b16 %v2296, %v2294
    %v2357 = vpack.c.b16 %v2299, %v2297
    %v2358 = vpack.c.b16 %v2300, %v2298
    %v2359 = vpack.c.b16 %v2303, %v2301
    %v2360 = vpack.c.b16 %v2304, %v2302
    %v2361 = vpack.c.b16 %v2307, %v2305
    %v2362 = vpack.c.b16 %v2308, %v2306
    %v2363 = vpack.c.b16 %v2311, %v2309
    %v2364 = vpack.c.b16 %v2312, %v2310
    %v2365 = vpack.c.b16 %v2315, %v2313
    %v2366 = vpack.c.b16 %v2316, %v2314
    %v2367 = vpack.c.b16 %v2319, %v2317
    %v2368 = vpack.c.b16 %v2320, %v2318
    %v2369 = vpack.c.b16 %v2323, %v2321
    %v2370 = vpack.c.b16 %v2324, %v2322
    %v2371 = vpack.c.b16 %v2327, %v2325
    %v2372 = vpack.c.b16 %v2328, %v2326
    %v2373 = vpack.c.b16 %v2331, %v2329
    %v2374 = vpack.c.b16 %v2332, %v2330
    %v2375 = vpack.c.b16 %v2335, %v2333
    %v2376 = vpack.c.b16 %v2336, %v2334
    %v2377 = vpack.c.b16 %v2339, %v2337
    %v2378 = vpack.c.b16 %v2340, %v2338
    %v2379 = vpack.c.b16 %v2343, %v2341
    %v2380 = vpack.c.b16 %v2344, %v2342
    %v2381 = vpack.c.b16 %v2347, %v2345
    %v2382 = vpack.c.b16 %v2348, %v2346
    %v2383 = vpack.c.b16 %v2351, %v2349
    %v2384 = vpack.c.b16 %v2352, %v2350
    %2417 = vmatprep.subr.bf16.mxu0 %v2368
    %2418 = vmatpush1.bf16.msra.mxu0 %v2367
    %2419 = vmatprep.subr.bf16.mxu0 %v2366
    %2420 = vmatpush1.bf16.msra.mxu0 %v2365
    %2421 = vmatprep.subr.bf16.mxu0 %v2364
    %2422 = vmatpush1.bf16.msra.mxu0 %v2363
    %2423 = vmatprep.subr.bf16.mxu0 %v2362
    %2424 = vmatpush1.bf16.msra.mxu0 %v2361
    %2425 = vmatprep.subr.bf16.mxu0 %v2360
    %2426 = vmatpush1.bf16.msra.mxu0 %v2359
    %2427 = vmatprep.subr.bf16.mxu0 %v2358
    %2428 = vmatpush1.bf16.msra.mxu0 %v2357
    %2429 = vmatprep.subr.bf16.mxu0 %v2356
    %2430 = vmatpush1.bf16.msra.mxu0 %v2355
    %2431 = vmatprep.subr.bf16.mxu0 %v2354
    %2432 = vmatpush1.bf16.msra.mxu0 %v2353
    %2433 = vmatprep.subr.bf16.mxu0 %v2384
    %2434 = vmatpush2.bf16.msra.mxu0 %v2383
    %2435 = vmatprep.subr.bf16.mxu0 %v2382
    %2436 = vmatpush2.bf16.msra.mxu0 %v2381
    %2437 = vmatprep.subr.bf16.mxu0 %v2380
    %2438 = vmatpush2.bf16.msra.mxu0 %v2379
    %2439 = vmatprep.subr.bf16.mxu0 %v2378
    %2440 = vmatpush2.bf16.msra.mxu0 %v2377
    %2441 = vmatprep.subr.bf16.mxu0 %v2376
    %2442 = vmatpush2.bf16.msra.mxu0 %v2375
    %2443 = vmatprep.subr.bf16.mxu0 %v2374
    %2444 = vmatpush2.bf16.msra.mxu0 %v2373
    %2445 = vmatprep.subr.bf16.mxu0 %v2372
    %2446 = vmatpush2.bf16.msra.mxu0 %v2371
    %2447 = vmatprep.subr.bf16.mxu0 %v2370
    %2448 = vmatpush2.bf16.msra.mxu0 %v2369
    %2449 = vmatprep.mubr.bf16.mxu0 %v2245
    %2450 = vmatmul.mubr.bf16.gmra.mxu0 %v2244
    %v2451 = vpop.f32.mrf.mxu0
    %v2452 = vadd.f32 %v2250, %v2451
    %v2453 = vpop.f32.mrf.mxu0
    %v2454 = vadd.f32 %v2254, %v2453
    %v2455 = vpop.f32.mrf.mxu0
    %v2456 = vadd.f32 %v2250, %v2455
    %v2457 = vpop.f32.mrf.mxu0
    %v2458 = vadd.f32 %v2254, %v2457
    %2459 = vdwg.mxu0
    %v2460 = vmax.f32 %v2452, 0.0
    %v2461 = vmax.f32 %v2454, 0.0
    %v2462 = vmax.f32 %v2456, 0.0
    %v2463 = vmax.f32 %v2458, 0.0
    %v2464 = vld [vmem:[#allocation7 + $0x40] sm:$0xf]
    %v2465 = vld [vmem:[#allocation7 + $0x84] sm:$0xf]
    %v2466 = vld [vmem:[#allocation7 + $0xc8] sm:$0xf]
    %v2467 = vld [vmem:[#allocation7 + $0x10c] sm:$0xf]
    %v2468 = vld [vmem:[#allocation7 + $0x150] sm:$0xf]
    %v2469 = vld [vmem:[#allocation7 + $0x194] sm:$0xf]
    %v2470 = vld [vmem:[#allocation7 + $0x1d8] sm:$0xf]
    %v2471 = vld [vmem:[#allocation7 + $0x21c] sm:$0xf]
    %v2472 = vld [vmem:[#allocation7 + $0x260] sm:$0xf]
    %v2473 = vld [vmem:[#allocation7 + $0x2a4] sm:$0xf]
    %v2474 = vld [vmem:[#allocation7 + $0x2e8] sm:$0xf]
    %v2475 = vld [vmem:[#allocation7 + $0x32c] sm:$0xf]
    %v2476 = vld [vmem:[#allocation7 + $0x370] sm:$0xf]
    %v2477 = vld [vmem:[#allocation7 + $0x3b4] sm:$0xf]
    %v2478 = vld [vmem:[#allocation7 + $0x3f8] sm:$0xf]
    %v2479 = vld [vmem:[#allocation7 + $0x43c] sm:$0xf]
    %v2480 = vld [vmem:[#allocation7 + $0x480] sm:$0xf]
    %v2481 = vld [vmem:[#allocation7 + $0x4c4] sm:$0xf]
    %v2482 = vld [vmem:[#allocation7 + $0x508] sm:$0xf]
    %v2483 = vld [vmem:[#allocation7 + $0x54c] sm:$0xf]
    %v2484 = vld [vmem:[#allocation7 + $0x590] sm:$0xf]
    %v2485 = vld [vmem:[#allocation7 + $0x5d4] sm:$0xf]
    %v2486 = vld [vmem:[#allocation7 + $0x618] sm:$0xf]
    %v2487 = vld [vmem:[#allocation7 + $0x65c] sm:$0xf]
    %v2488 = vld [vmem:[#allocation7 + $0x6a0] sm:$0xf]
    %v2489 = vld [vmem:[#allocation7 + $0x6e4] sm:$0xf]
    %v2490 = vld [vmem:[#allocation7 + $0x728] sm:$0xf]
    %v2491 = vld [vmem:[#allocation7 + $0x76c] sm:$0xf]
    %v2492 = vld [vmem:[#allocation7 + $0x7b0] sm:$0xf]
    %v2493 = vld [vmem:[#allocation7 + $0x7f4] sm:$0xf]
    %v2494 = vld [vmem:[#allocation7 + $0x838] sm:$0xf]
    %v2495 = vld [vmem:[#allocation7 + $0x87c] sm:$0xf]
    %v2496 = vld [vmem:[#allocation8 + $0x1e] sm:$0x1]
    %v2497 = vpack.c.bf16 %v2462, %v2460
    %v2498 = vpack.c.bf16 %v2463, %v2461
    %v2500 = vlaneseq
    %v2501 = vshrl.u32 %v2500, 7
    %v2502 = vsub.s32 0, %v2501
    %v2503 = vrot.slane %v2496, %v2502
    %v2537 = vunpack.c.l.b16 %v2464
    %v2538 = vunpack.c.l.b16 %v2465
    %v2539 = vunpack.c.l.b16 %v2466
    %v2540 = vunpack.c.l.b16 %v2467
    %v2541 = vunpack.c.l.b16 %v2468
    %v2542 = vunpack.c.l.b16 %v2469
    %v2543 = vunpack.c.l.b16 %v2470
    %v2544 = vunpack.c.l.b16 %v2471
    %v2545 = vunpack.c.l.b16 %v2472
    %v2546 = vunpack.c.l.b16 %v2473
    %v2547 = vunpack.c.l.b16 %v2474
    %v2548 = vunpack.c.l.b16 %v2475
    %v2549 = vunpack.c.l.b16 %v2476
    %v2550 = vunpack.c.l.b16 %v2477
    %v2551 = vunpack.c.l.b16 %v2478
    %v2552 = vunpack.c.l.b16 %v2479
    %v2553 = vunpack.c.l.b16 %v2480
    %v2554 = vunpack.c.l.b16 %v2481
    %v2555 = vunpack.c.l.b16 %v2482
    %v2556 = vunpack.c.l.b16 %v2483
    %v2557 = vunpack.c.l.b16 %v2484
    %v2558 = vunpack.c.l.b16 %v2485
    %v2559 = vunpack.c.l.b16 %v2486
    %v2560 = vunpack.c.l.b16 %v2487
    %v2561 = vunpack.c.l.b16 %v2488
    %v2562 = vunpack.c.l.b16 %v2489
    %v2563 = vunpack.c.l.b16 %v2490
    %v2564 = vunpack.c.l.b16 %v2491
    %v2565 = vunpack.c.l.b16 %v2492
    %v2566 = vunpack.c.l.b16 %v2493
    %v2567 = vunpack.c.l.b16 %v2494
    %v2568 = vunpack.c.l.b16 %v2495
    %v2569 = vpack.c.b16 %v2538, %v2537
    %v2570 = vpack.c.b16 %v2540, %v2539
    %v2571 = vpack.c.b16 %v2542, %v2541
    %v2572 = vpack.c.b16 %v2544, %v2543
    %v2573 = vpack.c.b16 %v2546, %v2545
    %v2574 = vpack.c.b16 %v2548, %v2547
    %v2575 = vpack.c.b16 %v2550, %v2549
    %v2576 = vpack.c.b16 %v2552, %v2551
    %v2577 = vpack.c.b16 %v2554, %v2553
    %v2578 = vpack.c.b16 %v2556, %v2555
    %v2579 = vpack.c.b16 %v2558, %v2557
    %v2580 = vpack.c.b16 %v2560, %v2559
    %v2581 = vpack.c.b16 %v2562, %v2561
    %v2582 = vpack.c.b16 %v2564, %v2563
    %v2583 = vpack.c.b16 %v2566, %v2565
    %v2584 = vpack.c.b16 %v2568, %v2567
    %2601 = vmatprep.subr.bf16.mxu0 0
    %2602 = vmatpush1.bf16.msra.mxu0 %v2576
    %2603 = vmatprep.subr.bf16.mxu0 0
    %2604 = vmatpush1.bf16.msra.mxu0 %v2575
    %2605 = vmatprep.subr.bf16.mxu0 0
    %2606 = vmatpush1.bf16.msra.mxu0 %v2574
    %2607 = vmatprep.subr.bf16.mxu0 0
    %2608 = vmatpush1.bf16.msra.mxu0 %v2573
    %2609 = vmatprep.subr.bf16.mxu0 0
    %2610 = vmatpush1.bf16.msra.mxu0 %v2572
    %2611 = vmatprep.subr.bf16.mxu0 0
    %2612 = vmatpush1.bf16.msra.mxu0 %v2571
    %2613 = vmatprep.subr.bf16.mxu0 0
    %2614 = vmatpush1.bf16.msra.mxu0 %v2570
    %2615 = vmatprep.subr.bf16.mxu0 0
    %2616 = vmatpush1.bf16.msra.mxu0 %v2569
    %2617 = vmatprep.subr.bf16.mxu0 0
    %2618 = vmatpush2.bf16.msra.mxu0 %v2584
    %2619 = vmatprep.subr.bf16.mxu0 0
    %2620 = vmatpush2.bf16.msra.mxu0 %v2583
    %2621 = vmatprep.subr.bf16.mxu0 0
    %2622 = vmatpush2.bf16.msra.mxu0 %v2582
    %2623 = vmatprep.subr.bf16.mxu0 0
    %2624 = vmatpush2.bf16.msra.mxu0 %v2581
    %2625 = vmatprep.subr.bf16.mxu0 0
    %2626 = vmatpush2.bf16.msra.mxu0 %v2580
    %2627 = vmatprep.subr.bf16.mxu0 0
    %2628 = vmatpush2.bf16.msra.mxu0 %v2579
    %2629 = vmatprep.subr.bf16.mxu0 0
    %2630 = vmatpush2.bf16.msra.mxu0 %v2578
    %2631 = vmatprep.subr.bf16.mxu0 0
    %2632 = vmatpush2.bf16.msra.mxu0 %v2577
    %2633 = vmatprep.mubr.bf16.mxu0 %v2498
    %2634 = vmatmul.mubr.bf16.gmra.mxu0 %v2497
    %v2635 = vpop.f32.mrf.mxu0
    %v2636 = vadd.f32 %v2503, %v2635
    %v2637 = vpop.f32.mrf.mxu0
    %v2638 = vpop.f32.mrf.mxu0
    %v2639 = vadd.f32 %v2503, %v2638
    %v2640 = vpop.f32.mrf.mxu0
    %2641 = vdwg.mxu0
    %2642 = vst [vmem:[#allocation10] sm:$0xff] %v2636
    %2643 = vst [vmem:[#allocation10 + $0x8] sm:$0xff] %v2639
    // Predicated region
    $region34: #{tpu_custom_call.1} parent=1 // pred_check
      _
    $region35: #{tpu_custom_call.1} parent=1 // pred_check_branch
      %2645 = sbr.rel (0) target = $region37
    $region36: #{tpu_custom_call.1} parent=1 // pred_region
      %s2647 = ssub.s32 256, 256
      %2648 = vsyncadd [#allocation4], %s2647
      %s2649 = sshll.u32 [#allocation10], 4
      %s2650 = int_to_ptr.vmem [resolvable:$true] %s2649
      %2655 = dma.vmem_to_hbm [thread:$0]  %s2650, 256, %s4, [#allocation4], 128, 128, 8
    $region37: #{tpu_custom_call.1} parent=1 // pred_fallthru
      _
    // Predicated region
    $region38: #{tpu_custom_call.1} parent=1 // pred_check
      _
    $region39: #{tpu_custom_call.1} parent=1 // pred_check_branch
      %2657 = sbr.rel (0) target = $region41
    $region40: #{tpu_custom_call.1} parent=1 // pred_region
      %2658 = dma.done [#allocation4], 256
    $region41: #{tpu_custom_call.1} parent=1 // pred_fallthru
      _
    %2659 = vsyncpa [#allocation3], 1
    %2660 = vsyncpa [#allocation6], 1
    %2661 = vsyncpa [#allocation9], 1
    %2662 = vsyncpa [#allocation4], 1

</llo_original>
